<compile_context>
chip_gen: v7x
topology: tpu7x:2x2x1
jax: 0.10.0
libtpu: 0.0.40
codegen_flags: <defaults>
</compile_context>

<pallas_src>
import functools

import jax
import jax.numpy as jnp
from jax.experimental import pallas as pl
from jax.experimental.pallas import tpu as pltpu


def _round_up(x, m):
    return ((x + m - 1) // m) * m


# ----------------------------------------------------------------------------
# Pallas kernel: per-(branch, row-tile) fused relu(relu(x @ W6 + b6) @ W7 + b7)
# with a K-reduction grid axis accumulated in an f32 VMEM scratch.
# ----------------------------------------------------------------------------
def _dual_mlp2_relu_kernel(x_ref, w6_ref, b6_ref, w7_ref, b7_ref, o_ref, acc_ref):
    k = pl.program_id(2)

    @pl.when(k == 0)
    def _():
        acc_ref[...] = jnp.zeros_like(acc_ref)

    # fc6 partial product for this K tile (bf16 into the MXU, f32 accumulate).
    acc_ref[...] += jnp.dot(x_ref[0], w6_ref[0], preferred_element_type=jnp.float32)

    @pl.when(k == pl.num_programs(2) - 1)
    def _():
        h = jnp.maximum(acc_ref[...] + b6_ref[0], 0.0)        # f32 epilogue
        h = h.astype(w7_ref.dtype)                            # bf16 into the MXU
        o = jnp.dot(h, w7_ref[0], preferred_element_type=jnp.float32)
        o_ref[0] = jnp.maximum(o + b7_ref[0], 0.0).astype(o_ref.dtype)


def dual_mlp2_relu(xs, w6s, b6s, w7s, b7s, *, out_dtype=jnp.float32,
                   tm_target=256, tk_target=2048):
    """Fused two-layer MLP + ReLU for B stacked branches.

    xs:  (B, R, K)  bf16      w6s: (B, K, H) bf16   b6s: (B, H) f32
    w7s: (B, H, N)  bf16      b7s: (B, N)    f32
    returns (B, R, N) out_dtype
    """
    B, R, K = xs.shape
    _, _, H = w6s.shape
    _, _, N = w7s.shape

    # ---- tiling -------------------------------------------------------------
    # Rows: pad to a multiple of 16 (bf16 sublane packing); tile at tm_target.
    R16 = max(16, _round_up(R, 16))
    tm = R16 if R16 <= tm_target else tm_target
    R_pad = _round_up(R16, tm)

    # Reduction dim: single tile if it fits, else tk_target (multiple of 128).
    if K <= tk_target:
        tk, K_pad = K, K
    else:
        tk = tk_target
        K_pad = _round_up(K, tk)

    if (R_pad, K_pad) != (R, K):
        xs = jnp.pad(xs, ((0, 0), (0, R_pad - R), (0, K_pad - K)))
    if K_pad != K:
        w6s = jnp.pad(w6s, ((0, 0), (0, K_pad - K), (0, 0)))

    n_r = R_pad // tm
    n_k = K_pad // tk

    b6_3d = b6s.reshape(B, 1, H)
    b7_3d = b7s.reshape(B, 1, N)

    out_itemsize = jnp.dtype(out_dtype).itemsize

    # ---- VMEM budget (pipeline double-buffers each streamed block) ----------
    dbl = 2
    vmem_needed = (
        dbl * tm * tk * xs.dtype.itemsize          # x tile
        + dbl * tk * H * w6s.dtype.itemsize        # W6 K-tile
        + dbl * H * N * w7s.dtype.itemsize         # W7 (resident per branch)
        + dbl * (H + N) * 4                        # biases
        + dbl * tm * N * out_itemsize              # output tile
        + tm * H * 4                               # f32 accumulator scratch
    )
    vmem_limit = int(min(max(2 * vmem_needed + (4 << 20), 32 << 20), 64 << 20))

    cost = pl.CostEstimate(
        flops=2 * B * R_pad * (K_pad * H + H * N),
        transcendentals=0,
        bytes_accessed=(xs.size * xs.dtype.itemsize
                        + w6s.size * w6s.dtype.itemsize
                        + w7s.size * w7s.dtype.itemsize
                        + b6_3d.size * 4 + b7_3d.size * 4
                        + B * R_pad * N * out_itemsize),
    )

    out = pl.pallas_call(
        _dual_mlp2_relu_kernel,
        out_shape=jax.ShapeDtypeStruct((B, R_pad, N), out_dtype),
        grid_spec=pltpu.PrefetchScalarGridSpec(
            num_scalar_prefetch=0,
            grid=(B, n_r, n_k),                                     # K last = reduction
            in_specs=[
                pl.BlockSpec((1, tm, tk), lambda b, r, k: (b, r, k)),  # x tile
                pl.BlockSpec((1, tk, H), lambda b, r, k: (b, k, 0)),   # W6 K-tile
                pl.BlockSpec((1, 1, H), lambda b, r, k: (b, 0, 0)),    # b6 (resident)
                pl.BlockSpec((1, H, N), lambda b, r, k: (b, 0, 0)),    # W7 (resident)
                pl.BlockSpec((1, 1, N), lambda b, r, k: (b, 0, 0)),    # b7 (resident)
            ],
            out_specs=pl.BlockSpec((1, tm, N), lambda b, r, k: (b, r, 0)),
            scratch_shapes=[pltpu.VMEM((tm, H), jnp.float32)],
        ),
        compiler_params=pltpu.CompilerParams(
            dimension_semantics=("parallel", "parallel", "arbitrary"),
            vmem_limit_bytes=vmem_limit,
        ),
        cost_estimate=cost,
    )(xs, w6s, b6_3d, w7s, b7_3d)

    return out[:, :R, :]


# ----------------------------------------------------------------------------
# ROIAlign (single FPN level) — one gather per ROI + separable interp matmuls.
# Both branches (RGB / depth) are pooled in one pass over a stacked leading axis.
# TODO(synk): multi-level FPN level assignment / cat_all_levels of the
#             reference Pooler is not replicated (single spatial scale only).
# TODO(synk): adaptive sampling_ratio <= 0 (torch's ceil(roi_h/pooled)) and a
#             fully Pallas-fused ROIAlign (scalar-prefetched rois driving
#             manual DMA) are not implemented.
# ----------------------------------------------------------------------------
def _roi_align_one(feats, roi, *, spatial_scale, pooled, sampling_ratio):
    """feats: (Bb, N, C, H, W) stacked branches; roi: (5,). -> (Bb, C, P, P)."""
    Bb, N, C, H, W = feats.shape

    # Single gather of this ROI's image from every branch (no one-hot matmul).
    fmap = jax.lax.dynamic_index_in_dim(
        feats, roi[0].astype(jnp.int32), axis=1, keepdims=False)   # (Bb, C, H, W)

    x1 = roi[1] * spatial_scale
    y1 = roi[2] * spatial_scale
    x2 = roi[3] * spatial_scale
    y2 = roi[4] * spatial_scale
    roi_w = jnp.maximum(x2 - x1, 1.0)
    roi_h = jnp.maximum(y2 - y1, 1.0)
    bin_w = roi_w / pooled
    bin_h = roi_h / pooled

    sr = sampling_ratio
    p = jnp.arange(pooled, dtype=jnp.float32)
    s = jnp.arange(sr, dtype=jnp.float32)
    ys = (y1 + p[:, None] * bin_h + (s[None, :] + 0.5) * bin_h / sr).reshape(-1)
    xs = (x1 + p[:, None] * bin_w + (s[None, :] + 0.5) * bin_w / sr).reshape(-1)

    def interp_matrix(coords, size):
        # torch ROIAlign: sample invalid only if coord < -1 or coord > size.
        valid = (coords >= -1.0) & (coords <= size)
        c = jnp.clip(coords, 0.0, size - 1.0)
        lo = jnp.floor(c).astype(jnp.int32)
        hi = jnp.minimum(lo + 1, size - 1)
        frac = c - lo.astype(jnp.float32)
        grid = jnp.arange(size, dtype=jnp.int32)
        A = ((grid[None, :] == lo[:, None]).astype(jnp.float32) * (1.0 - frac)[:, None]
             + (grid[None, :] == hi[:, None]).astype(jnp.float32) * frac[:, None])
        return A * valid[:, None].astype(jnp.float32)

    Ay = interp_matrix(ys, H)                                   # (Sy, H)
    Ax = interp_matrix(xs, W)                                   # (Sx, W)

    # Separable bilinear interpolation as two small matmuls (MXU-friendly).
    val = jnp.einsum('sh,bchw->bcsw', Ay, fmap)                 # (Bb, C, Sy, W)
    val = jnp.einsum('bcsw,tw->bcst', val, Ax)                  # (Bb, C, Sy, Sx)

    # Average the sr*sr samples per bin -> (Bb, C, P, P)
    val = val.reshape(Bb, C, pooled, sr, pooled, sr)
    return val.mean(axis=(3, 5))


def roi_align(feats_stacked, rois, spatial_scale, pooled, sampling_ratio):
    """feats_stacked: (Bb, N, C, H, W); rois: (R, 5) -> (Bb, R, C, P, P)."""
    fn = functools.partial(_roi_align_one, spatial_scale=spatial_scale,
                           pooled=pooled, sampling_ratio=sampling_ratio)
    out = jax.vmap(fn, in_axes=(None, 0))(feats_stacked, rois)  # (R, Bb, C, P, P)
    return jnp.transpose(out, (1, 0, 2, 3, 4))


# ----------------------------------------------------------------------------
# Module wrapper
# ----------------------------------------------------------------------------
class FPN2MLPFeatureExtractorDepth:
    def __init__(self, key, in_channels, resolution, spatial_scale,
                 sampling_ratio, representation_size, half_out=False):
        self.resolution = resolution
        self.spatial_scale = spatial_scale
        self.sampling_ratio = sampling_ratio
        input_size = in_channels * resolution ** 2
        self.resize_channels = input_size
        # Matches the reference module: out_channels reports the MLP head dim
        # (or half of it), even though fc7/dfc7 output 4096.
        self.out_channels = representation_size // 2 if half_out else representation_size

        ks = jax.random.split(key, 4)

        def make_fc(k, fan_in, fan_out):
            # kaiming_uniform_(weight, a=1) -> U(-sqrt(3/fan_in), +sqrt(3/fan_in)),
            # bias = 0 (as in make_fc with use_gn=False).  Weights stored bf16.
            bound = (3.0 / fan_in) ** 0.5
            w = jax.random.uniform(k, (fan_in, fan_out), jnp.float32, -bound, bound)
            return w.astype(jnp.bfloat16), jnp.zeros((fan_out,), jnp.float32)

        w6, b6 = make_fc(ks[0], input_size, representation_size)
        w7, b7 = make_fc(ks[1], representation_size, 4096)
        dw6, db6 = make_fc(ks[2], input_size, representation_size)
        dw7, db7 = make_fc(ks[3], representation_size, 4096)

        # Pre-stacked (branch-major) parameters for the fused dual-branch kernel.
        self.w6s = jnp.stack([w6, dw6])        # (2, K, H)  bf16
        self.b6s = jnp.stack([b6, db6])        # (2, H)     f32
        self.w7s = jnp.stack([w7, dw7])        # (2, H, N)  bf16
        self.b7s = jnp.stack([b7, db7])        # (2, N)     f32

    def __call__(self, x, rois, depth_features=None):
        if depth_features is not None:
            stacked = jnp.stack([x, depth_features])            # (2, N, C, H, W)
            pooled = roi_align(stacked, rois, self.spatial_scale,
                               self.resolution, self.sampling_ratio)
            xs = pooled.reshape(2, pooled.shape[1], -1).astype(jnp.bfloat16)
            out = dual_mlp2_relu(xs, self.w6s, self.b6s, self.w7s, self.b7s)
            return (out[0], out[1], None, None)

        pooled = roi_align(x[None], rois, self.spatial_scale,
                           self.resolution, self.sampling_ratio)
        xs = pooled.reshape(1, pooled.shape[1], -1).astype(jnp.bfloat16)
        out = dual_mlp2_relu(xs, self.w6s[:1], self.b6s[:1],
                             self.w7s[:1], self.b7s[:1])
        return (out[0], None, None, None)


if __name__ == "__main__":
    key = jax.random.PRNGKey(0)
    k_feat, k_depth, k_roi, k_params = jax.random.split(key, 4)

    # Config: in_channels=4, POOLER_RESOLUTION=4, POOLER_SCALES=(0.25,),
    # POOLER_SAMPLING_RATIO=2, MLP_HEAD_DIM=128, USE_GN=False.
    n_imgs, C, H, W = 2, 4, 16, 16
    resolution, scale, sampling_ratio, rep = 4, 0.25, 2, 128
    rois_per_img = 4

    feats = jax.random.normal(k_feat, (n_imgs, C, H, W), jnp.float32)
    depth_feats = jax.random.normal(k_depth, (n_imgs, C, H, W), jnp.float32)

    # Proposals in image coordinates (image size = H/scale = 64):
    # rois: (R, 5) = [batch_idx, x1, y1, x2, y2]
    R = n_imgs * rois_per_img
    xy1 = jax.random.uniform(k_roi, (R, 2), jnp.float32, 0.0, 40.0)
    wh = jax.random.uniform(jax.random.fold_in(k_roi, 1), (R, 2),
                            jnp.float32, 8.0, 24.0)
    batch_idx = jnp.repeat(jnp.arange(n_imgs, dtype=jnp.float32), rois_per_img)
    rois = jnp.concatenate([batch_idx[:, None], xy1, xy1 + wh], axis=1)

    module = FPN2MLPFeatureExtractorDepth(
        k_params, in_channels=C, resolution=resolution, spatial_scale=scale,
        sampling_ratio=sampling_ratio, representation_size=rep)

    x_out, d_out, _, _ = module(feats, rois, depth_features=depth_feats)
    jax.block_until_ready(x_out)
    jax.block_until_ready(d_out)

    assert x_out.shape == (R, 4096) and d_out.shape == (R, 4096)
    assert bool(jnp.all(x_out >= 0)) and bool(jnp.all(d_out >= 0))

    # Also exercise the depth_features=None path (single-branch grid).
    x_only, d_none, _, _ = module(feats, rois, depth_features=None)
    jax.block_until_ready(x_only)
    assert x_only.shape == (R, 4096) and d_none is None

    print("KERNEL_OK")
</pallas_src>

<mosaic_0001>
module attributes {stable_mosaic.version = 11 : i64} {
  func.func @_dual_mlp2_relu_kernel(%arg0: i32, %arg1: i32, %arg2: i32, %arg3: memref<1x16x64xbf16, #tpu.memory_space<vmem>>, %arg4: memref<1x64x128xbf16, #tpu.memory_space<vmem>>, %arg5: memref<1x1x128xf32, #tpu.memory_space<vmem>>, %arg6: memref<1x128x4096xbf16, #tpu.memory_space<vmem>>, %arg7: memref<1x1x4096xf32, #tpu.memory_space<vmem>>, %arg8: memref<1x16x4096xf32, #tpu.memory_space<vmem>>, %arg9: memref<16x128xf32, #tpu.memory_space<vmem>>) attributes {dimension_semantics = [#tpu.dimension_semantics<parallel>, #tpu.dimension_semantics<parallel>, #tpu.dimension_semantics<arbitrary>], iteration_bounds = array<i64: 2, 1, 1>, scalar_prefetch = 0 : i64, scratch_operands = 1 : i64, tpu.core_type = #tpu.core_type<tc>, window_params = [{transform_indices = @transform_0, window_bounds = array<i64: 1, 16, 64>}, {transform_indices = @transform_1, window_bounds = array<i64: 1, 64, 128>}, {transform_indices = @transform_2, window_bounds = array<i64: 1, 1, 128>}, {transform_indices = @transform_3, window_bounds = array<i64: 1, 128, 4096>}, {transform_indices = @transform_4, window_bounds = array<i64: 1, 1, 4096>}, {transform_indices = @transform_5, window_bounds = array<i64: 1, 16, 4096>}]} {
    %c0_i32 = arith.constant 0 : i32
    %0 = arith.cmpi eq, %arg2, %c0_i32 : i32
    %1 = arith.extui %0 : i1 to i32
    %c0_i32_0 = arith.constant 0 : i32
    %2 = arith.cmpi ne, %1, %c0_i32_0 : i32
    scf.if %2 {
      %cst_12 = arith.constant 0.000000e+00 : f32
      %14 = vector.broadcast %cst_12 : f32 to vector<16x128xf32>
      %c0_13 = arith.constant 0 : index
      %c0_14 = arith.constant 0 : index
      %15 = vector.load %arg9[%c0_13, %c0_14] : memref<16x128xf32, #tpu.memory_space<vmem>>, vector<16x128xf32>
      tpu.vector_store %arg9[%c0_13, %c0_14], %14 {strides = array<i32>} : memref<16x128xf32, #tpu.memory_space<vmem>>, vector<16x128xf32>,
    } else {
    }
    %c0 = arith.constant 0 : index
    %c0_1 = arith.constant 0 : index
    %3 = vector.load %arg9[%c0, %c0_1] : memref<16x128xf32, #tpu.memory_space<vmem>>, vector<16x128xf32>
    %c0_2 = arith.constant 0 : index
    %c0_3 = arith.constant 0 : index
    %c0_4 = arith.constant 0 : index
    %4 = vector.load %arg3[%c0_2, %c0_3, %c0_4] : memref<1x16x64xbf16, #tpu.memory_space<vmem>>, vector<1x16x64xbf16>
    %5 = vector.shape_cast %4 : vector<1x16x64xbf16> to vector<16x64xbf16>
    %c0_5 = arith.constant 0 : index
    %c0_6 = arith.constant 0 : index
    %c0_7 = arith.constant 0 : index
    %6 = vector.load %arg4[%c0_5, %c0_6, %c0_7] : memref<1x64x128xbf16, #tpu.memory_space<vmem>>, vector<1x64x128xbf16>
    %7 = vector.shape_cast %6 : vector<1x64x128xbf16> to vector<64x128xbf16>
    %cst = arith.constant dense<0.000000e+00> : vector<16x128xf32>
    %8 = tpu.matmul %5, %7, %cst {dimension_numbers = #tpu.dot_dimension_numbers<[1], [0], [0], [1], [0, 0, 1, 1], [], []>} : vector<16x64xbf16>, vector<64x128xbf16>, vector<16x128xf32> -> vector<16x128xf32>
    %9 = arith.addf %3, %8 : vector<16x128xf32>
    %c0_8 = arith.constant 0 : index
    %c0_9 = arith.constant 0 : index
    %10 = vector.load %arg9[%c0_8, %c0_9] : memref<16x128xf32, #tpu.memory_space<vmem>>, vector<16x128xf32>
    tpu.vector_store %arg9[%c0_8, %c0_9], %9 {strides = array<i32>} : memref<16x128xf32, #tpu.memory_space<vmem>>, vector<16x128xf32>,
    %c0_i32_10 = arith.constant 0 : i32
    %11 = arith.cmpi eq, %arg2, %c0_i32_10 : i32
    %12 = arith.extui %11 : i1 to i32
    %c0_i32_11 = arith.constant 0 : i32
    %13 = arith.cmpi ne, %12, %c0_i32_11 : i32
    scf.if %13 {
      %c0_12 = arith.constant 0 : index
      %c0_13 = arith.constant 0 : index
      %14 = vector.load %arg9[%c0_12, %c0_13] : memref<16x128xf32, #tpu.memory_space<vmem>>, vector<16x128xf32>
      %c0_14 = arith.constant 0 : index
      %c0_15 = arith.constant 0 : index
      %c0_16 = arith.constant 0 : index
      %15 = vector.load %arg5[%c0_14, %c0_15, %c0_16] : memref<1x1x128xf32, #tpu.memory_space<vmem>>, vector<1x1x128xf32>
      %16 = vector.shape_cast %15 : vector<1x1x128xf32> to vector<1x128xf32>
      %17 = vector.broadcast %16 : vector<1x128xf32> to vector<16x128xf32>
      %18 = arith.addf %14, %17 : vector<16x128xf32>
      %cst_17 = arith.constant 0.000000e+00 : f32
      %19 = vector.broadcast %cst_17 : f32 to vector<16x128xf32>
      %20 = arith.maximumf %18, %19 : vector<16x128xf32>
      %21 = arith.truncf %20 : vector<16x128xf32> to vector<16x128xbf16>
      %c0_18 = arith.constant 0 : index
      %c0_19 = arith.constant 0 : index
      %c0_20 = arith.constant 0 : index
      %22 = vector.load %arg6[%c0_18, %c0_19, %c0_20] : memref<1x128x4096xbf16, #tpu.memory_space<vmem>>, vector<1x128x4096xbf16>
      %23 = vector.shape_cast %22 : vector<1x128x4096xbf16> to vector<128x4096xbf16>
      %cst_21 = arith.constant dense<0.000000e+00> : vector<16x4096xf32>
      %24 = tpu.matmul %21, %23, %cst_21 {dimension_numbers = #tpu.dot_dimension_numbers<[1], [0], [0], [1], [0, 0, 1, 1], [], []>} : vector<16x128xbf16>, vector<128x4096xbf16>, vector<16x4096xf32> -> vector<16x4096xf32>
      %c0_22 = arith.constant 0 : index
      %c0_23 = arith.constant 0 : index
      %c0_24 = arith.constant 0 : index
      %25 = vector.load %arg7[%c0_22, %c0_23, %c0_24] : memref<1x1x4096xf32, #tpu.memory_space<vmem>>, vector<1x1x4096xf32>
      %26 = vector.shape_cast %25 : vector<1x1x4096xf32> to vector<1x4096xf32>
      %27 = vector.broadcast %26 : vector<1x4096xf32> to vector<16x4096xf32>
      %28 = arith.addf %24, %27 : vector<16x4096xf32>
      %cst_25 = arith.constant 0.000000e+00 : f32
      %29 = vector.broadcast %cst_25 : f32 to vector<16x4096xf32>
      %30 = arith.maximumf %28, %29 : vector<16x4096xf32>
      %c0_26 = arith.constant 0 : index
      %c0_27 = arith.constant 0 : index
      %c0_28 = arith.constant 0 : index
      %31 = vector.load %arg8[%c0_26, %c0_27, %c0_28] : memref<1x16x4096xf32, #tpu.memory_space<vmem>>, vector<1x16x4096xf32>
      %32 = vector.shape_cast %31 : vector<1x16x4096xf32> to vector<16x4096xf32>
      %33 = vector.shape_cast %30 : vector<16x4096xf32> to vector<1x16x4096xf32>
      tpu.vector_store %arg8[%c0_26, %c0_27, %c0_28], %33 {strides = array<i32>} : memref<1x16x4096xf32, #tpu.memory_space<vmem>>, vector<1x16x4096xf32>,
    } else {
    }
    return
  }
  func.func @transform_0(%arg0: i32, %arg1: i32, %arg2: i32) -> (i32, i32, i32) {
    %c0_i32 = arith.constant 0 : i32
    return %arg0, %arg1, %arg2 : i32, i32, i32
  }
  func.func @transform_1(%arg0: i32, %arg1: i32, %arg2: i32) -> (i32, i32, i32) {
    %c0_i32 = arith.constant 0 : i32
    %c0_i32_0 = arith.constant 0 : i32
    return %arg0, %arg2, %c0_i32 : i32, i32, i32
  }
  func.func @transform_2(%arg0: i32, %arg1: i32, %arg2: i32) -> (i32, i32, i32) {
    %c0_i32 = arith.constant 0 : i32
    %c0_i32_0 = arith.constant 0 : i32
    %c0_i32_1 = arith.constant 0 : i32
    return %arg0, %c0_i32, %c0_i32_0 : i32, i32, i32
  }
  func.func @transform_3(%arg0: i32, %arg1: i32, %arg2: i32) -> (i32, i32, i32) {
    %c0_i32 = arith.constant 0 : i32
    %c0_i32_0 = arith.constant 0 : i32
    %c0_i32_1 = arith.constant 0 : i32
    return %arg0, %c0_i32, %c0_i32_0 : i32, i32, i32
  }
  func.func @transform_4(%arg0: i32, %arg1: i32, %arg2: i32) -> (i32, i32, i32) {
    %c0_i32 = arith.constant 0 : i32
    %c0_i32_0 = arith.constant 0 : i32
    %c0_i32_1 = arith.constant 0 : i32
    return %arg0, %c0_i32, %c0_i32_0 : i32, i32, i32
  }
  func.func @transform_5(%arg0: i32, %arg1: i32, %arg2: i32) -> (i32, i32, i32) {
    %c0_i32 = arith.constant 0 : i32
    %c0_i32_0 = arith.constant 0 : i32
    return %arg0, %arg1, %c0_i32 : i32, i32, i32
  }
}

</mosaic_0001>

<llo_original>
// kernel: tpu_custom_call.1
$region0: #{tpu_custom_call.1}
  #allocation0 [shape = 'u32[]', space=smem, size = 0x4, offset = 0x4, fixed_abs, tag = 'smem constant byte address 0x4 - core index']
  #allocation1 [shape = 'u32[144,128]{1,0:T(1,128)}', space=vmem, size = 0x12000, scoped, tag = 'internal scratch']
  #allocation2 [shape = 'f32[16,128]{1,0:T(8,128)}', space=vmem, size = 0x2000, scoped, tag = 'scratch operand']
  %s0 = inlined_call_operand.hbm [shape: bf16[2,16,64], index: 0, kind: input, shape index: {}]
  %s1 = inlined_call_operand.hbm [shape: bf16[2,64,128], index: 1, kind: input, shape index: {}]
  %s2 = inlined_call_operand.hbm [shape: f32[2,1,128], index: 2, kind: input, shape index: {}]
  %s3 = inlined_call_operand.hbm [shape: bf16[2,128,4096], index: 3, kind: input, shape index: {}]
  %s4 = inlined_call_operand.hbm [shape: f32[2,1,4096], index: 4, kind: input, shape index: {}]
  %s5 = inlined_call_operand.hbm [shape: f32[2,16,4096], index: 5, kind: output, shape index: {}]
  %s6 = sld [smem:[#allocation0]]
  $region81: #{tpu_custom_call.1} parent=0
    _
  %s8 = ssub.s32 1, %s6
  %s9 = scalar_select 0, %s8, %s6
  $region1: #{tpu_custom_call.1} parent=0
    #allocation3 [shape = 'u8[8192]{0}', space=vmem, size = 0x2000, scoped, tag = 'input window, operand 0']
    #allocation4 [shape = 's32[2]{0}', space=sflag, size = 0x8, scoped, tag = 'scoped memory for tpu_custom_call.1']
    #allocation5 [shape = 's32[2]{0}', space=sflag, size = 0x8, scoped, tag = 'scoped memory for tpu_custom_call.1']
    #allocation6 [shape = 'u8[32768]{0}', space=vmem, size = 0x8000, scoped, tag = 'input window, operand 1']
    #allocation7 [shape = 's32[2]{0}', space=sflag, size = 0x8, scoped, tag = 'scoped memory for tpu_custom_call.1']
    #allocation8 [shape = 'u8[1024]{0}', space=vmem, size = 0x400, scoped, tag = 'input window, operand 2']
    #allocation9 [shape = 'u8[2097152]{0}', space=vmem, size = 0x200000, scoped, tag = 'input window, operand 3']
    #allocation10 [shape = 's32[2]{0}', space=sflag, size = 0x8, scoped, tag = 'scoped memory for tpu_custom_call.1']
    #allocation11 [shape = 'u8[32768]{0}', space=vmem, size = 0x8000, scoped, tag = 'input window, operand 4']
    #allocation12 [shape = 'u8[524288]{0}', space=vmem, size = 0x80000, scoped, tag = 'output window, operand 0']
    %10 = vsyncpa [#allocation4], 0
    %s11 = scalar_lea.sflag [#allocation4], 1
    %12 = vsyncpa %s11, 0
    %13 = vsyncpa [#allocation7], 0
    %s14 = scalar_lea.sflag [#allocation7], 1
    %15 = vsyncpa %s14, 0
    %16 = vsyncpa [#allocation10], 0
    %s17 = scalar_lea.sflag [#allocation10], 1
    %18 = vsyncpa %s17, 0
    %19 = vsyncpa [#allocation5], 0
    %s20 = scalar_lea.sflag [#allocation5], 1
    %21 = vsyncpa %s20, 0
    loop: start=0, step=1, limit=4
    $region2: #{tpu_custom_call.1} parent=1 // loop_pre_header
      _
    $region3: #{tpu_custom_call.1} parent=1 // loop_header
      %s23 = sphi 0, %s27
      %p24 = scmp.ge.s32.totalorder %s23, 4
      %s30 = sphi 0, %s49
      %s31 = sphi 0, %s45
      %s32 = sphi 0, %s41
      %s33 = sphi 0, %s30
      %s34 = sphi 0, %s31
      %s35 = sphi 0, %s32
      %s36 = sphi 0, %s33
      %s37 = sphi 0, %s34
      %s38 = sphi 0, %s35
      %s56 = sphi 0, %s58
      %s59 = sphi 0, %s56
      %s60 = sphi 0, %s59
      %s76 = sphi 0, %s60
      %s84 = sphi 0, %s86
      %s87 = sphi 0, %s84
      %s88 = sphi 0, %s87
      %s104 = sphi 0, %s88
      %s110 = sphi 0, %s112
      %s113 = sphi 0, %s110
      %s114 = sphi 0, %s113
      %s130 = sphi 0, %s114
      %s136 = sphi 0, %s138
      %s139 = sphi 0, %s136
      %s140 = sphi 0, %s139
      %s156 = sphi 0, %s140
      %s162 = sphi 0, %s164
      %s165 = sphi 0, %s162
      %s166 = sphi 0, %s165
      %s182 = sphi 0, %s166
      %s190 = sphi 0, %s192
      %s193 = sphi 0, %s190
      %s194 = sphi 0, %s193
      %s210 = sphi 0, %s194
    $region4: #{tpu_custom_call.1} parent=1 // loop_header_branch
      %26 = sbr.rel (%p24) target = $region8
    $region5: #{tpu_custom_call.1} parent=1 // loop_body
      %s28 = ssub.s32 %s23, 1
      %s29 = ssub.s32 %s23, 2
      %s39 = sadd.s32 1, %s32
      %p40 = scmp.ge.s32.totalorder %s39, 1
      %s41 = scalar_select %p40, 0, %s39
      %s42 = sadd.s32 1, %s31
      %s43 = scalar_select %p40, %s42, %s31
      %p44 = scmp.ge.s32.totalorder %s43, 1
      %s45 = scalar_select %p44, 0, %s43
      %s46 = sadd.s32 1, %s30
      %s47 = scalar_select %p44, %s46, %s30
      %p48 = scmp.ge.s32.totalorder %s47, 2
      %s49 = scalar_select %p48, 0, %s47
      %s50 = ssub.s32 %s30, %s49
      %s51 = ssub.s32 %s31, %s45
      %s52 = sor.u32 %s50, %s51
      %s53 = ssub.s32 %s32, %s41
      %s54 = sor.u32 %s52, %s53
      %p55 = scmp.eq.s32.totalorder %s54, 0
      %s57 = sadd.s32 %s56, 1
      %s58 = scalar_select %p55, %s56, %s57
      %p61 = pneg %p55
      %p62 = scmp.eq.s32.totalorder %s23, 1
      %p63 = por %p61, %p62
      %p64 = scmp.ne.s32.totalorder %s56, %s59
      %p65 = scmp.eq.s32.totalorder %s23, 0
      %p66 = por %p64, %p65
      %p67 = scmp.ne.s32.totalorder %s56, %s59
      %p68 = scmp.eq.s32.totalorder %s28, 1
      %p69 = por %p67, %p68
      %p70 = scmp.ne.s32.totalorder %s59, %s60
      %p71 = scmp.eq.s32.totalorder %s28, 0
      %p72 = por %p70, %p71
      %p73 = scmp.ne.s32.totalorder %s59, %s60
      %p74 = scmp.eq.s32.totalorder %s29, 1
      %p75 = por %p73, %p74
      %p77 = scmp.ne.s32.totalorder %s60, %s76
      %p78 = scmp.eq.s32.totalorder %s29, 0
      %p79 = por %p77, %p78
      %s80 = ssub.s32 %s30, %s49
      %s81 = ssub.s32 %s32, %s41
      %s82 = sor.u32 %s80, %s81
      %p83 = scmp.eq.s32.totalorder %s82, 0
      %s85 = sadd.s32 %s84, 1
      %s86 = scalar_select %p83, %s84, %s85
      %p89 = pneg %p83
      %p90 = scmp.eq.s32.totalorder %s23, 1
      %p91 = por %p89, %p90
      %p92 = scmp.ne.s32.totalorder %s84, %s87
      %p93 = scmp.eq.s32.totalorder %s23, 0
      %p94 = por %p92, %p93
      %p95 = scmp.ne.s32.totalorder %s84, %s87
      %p96 = scmp.eq.s32.totalorder %s28, 1
      %p97 = por %p95, %p96
      %p98 = scmp.ne.s32.totalorder %s87, %s88
      %p99 = scmp.eq.s32.totalorder %s28, 0
      %p100 = por %p98, %p99
      %p101 = scmp.ne.s32.totalorder %s87, %s88
      %p102 = scmp.eq.s32.totalorder %s29, 1
      %p103 = por %p101, %p102
      %p105 = scmp.ne.s32.totalorder %s88, %s104
      %p106 = scmp.eq.s32.totalorder %s29, 0
      %p107 = por %p105, %p106
      %s108 = ssub.s32 %s30, %s49
      %p109 = scmp.eq.s32.totalorder %s108, 0
      %s111 = sadd.s32 %s110, 1
      %s112 = scalar_select %p109, %s110, %s111
      %p115 = pneg %p109
      %p116 = scmp.eq.s32.totalorder %s23, 1
      %p117 = por %p115, %p116
      %p118 = scmp.ne.s32.totalorder %s110, %s113
      %p119 = scmp.eq.s32.totalorder %s23, 0
      %p120 = por %p118, %p119
      %p121 = scmp.ne.s32.totalorder %s110, %s113
      %p122 = scmp.eq.s32.totalorder %s28, 1
      %p123 = por %p121, %p122
      %p124 = scmp.ne.s32.totalorder %s113, %s114
      %p125 = scmp.eq.s32.totalorder %s28, 0
      %p126 = por %p124, %p125
      %p127 = scmp.ne.s32.totalorder %s113, %s114
      %p128 = scmp.eq.s32.totalorder %s29, 1
      %p129 = por %p127, %p128
      %p131 = scmp.ne.s32.totalorder %s114, %s130
      %p132 = scmp.eq.s32.totalorder %s29, 0
      %p133 = por %p131, %p132
      %s134 = ssub.s32 %s30, %s49
      %p135 = scmp.eq.s32.totalorder %s134, 0
      %s137 = sadd.s32 %s136, 1
      %s138 = scalar_select %p135, %s136, %s137
      %p141 = pneg %p135
      %p142 = scmp.eq.s32.totalorder %s23, 1
      %p143 = por %p141, %p142
      %p144 = scmp.ne.s32.totalorder %s136, %s139
      %p145 = scmp.eq.s32.totalorder %s23, 0
      %p146 = por %p144, %p145
      %p147 = scmp.ne.s32.totalorder %s136, %s139
      %p148 = scmp.eq.s32.totalorder %s28, 1
      %p149 = por %p147, %p148
      %p150 = scmp.ne.s32.totalorder %s139, %s140
      %p151 = scmp.eq.s32.totalorder %s28, 0
      %p152 = por %p150, %p151
      %p153 = scmp.ne.s32.totalorder %s139, %s140
      %p154 = scmp.eq.s32.totalorder %s29, 1
      %p155 = por %p153, %p154
      %p157 = scmp.ne.s32.totalorder %s140, %s156
      %p158 = scmp.eq.s32.totalorder %s29, 0
      %p159 = por %p157, %p158
      %s160 = ssub.s32 %s30, %s49
      %p161 = scmp.eq.s32.totalorder %s160, 0
      %s163 = sadd.s32 %s162, 1
      %s164 = scalar_select %p161, %s162, %s163
      %p167 = pneg %p161
      %p168 = scmp.eq.s32.totalorder %s23, 1
      %p169 = por %p167, %p168
      %p170 = scmp.ne.s32.totalorder %s162, %s165
      %p171 = scmp.eq.s32.totalorder %s23, 0
      %p172 = por %p170, %p171
      %p173 = scmp.ne.s32.totalorder %s162, %s165
      %p174 = scmp.eq.s32.totalorder %s28, 1
      %p175 = por %p173, %p174
      %p176 = scmp.ne.s32.totalorder %s165, %s166
      %p177 = scmp.eq.s32.totalorder %s28, 0
      %p178 = por %p176, %p177
      %p179 = scmp.ne.s32.totalorder %s165, %s166
      %p180 = scmp.eq.s32.totalorder %s29, 1
      %p181 = por %p179, %p180
      %p183 = scmp.ne.s32.totalorder %s166, %s182
      %p184 = scmp.eq.s32.totalorder %s29, 0
      %p185 = por %p183, %p184
      %s186 = ssub.s32 %s30, %s49
      %s187 = ssub.s32 %s31, %s45
      %s188 = sor.u32 %s186, %s187
      %p189 = scmp.eq.s32.totalorder %s188, 0
      %s191 = sadd.s32 %s190, 1
      %s192 = scalar_select %p189, %s190, %s191
      %p195 = pneg %p189
      %p196 = scmp.eq.s32.totalorder %s23, 1
      %p197 = por %p195, %p196
      %p198 = scmp.ne.s32.totalorder %s190, %s193
      %p199 = scmp.eq.s32.totalorder %s23, 0
      %p200 = por %p198, %p199
      %p201 = scmp.ne.s32.totalorder %s190, %s193
      %p202 = scmp.eq.s32.totalorder %s28, 1
      %p203 = por %p201, %p202
      %p204 = scmp.ne.s32.totalorder %s193, %s194
      %p205 = scmp.eq.s32.totalorder %s28, 0
      %p206 = por %p204, %p205
      %p207 = scmp.ne.s32.totalorder %s193, %s194
      %p208 = scmp.eq.s32.totalorder %s29, 1
      %p209 = por %p207, %p208
      %p211 = scmp.ne.s32.totalorder %s194, %s210
      %p212 = scmp.eq.s32.totalorder %s29, 0
      %p213 = por %p211, %p212
      %p214 = scmp.le.s32.totalorder 1, %s23
      %p215 = scmp.lt.s32.totalorder %s23, 3
      %p216 = pnand %p214, %p215
      %p217 = pneg %p216
      // Predicated region
      $region9: #{tpu_custom_call.1} parent=5 // pred_check
        _
      $region10: #{tpu_custom_call.1} parent=5 // pred_check_branch
        %219 = sbr.rel (%p216) target = $region12
      $region11: #{tpu_custom_call.1} parent=5 // pred_region
        %s220 = ssub.s32 %s23, 1
      $region12: #{tpu_custom_call.1} parent=5 // pred_fallthru
        _
      %p221 = scmp.lt.s32.totalorder %s23, 2
      // Predicated region
      $region13: #{tpu_custom_call.1} parent=5 // pred_check
        %p222 = pneg %p221
      $region14: #{tpu_custom_call.1} parent=5 // pred_check_branch
        %224 = sbr.rel (%p222) target = $region16
      $region15: #{tpu_custom_call.1} parent=5 // pred_region
        // Predicated region
        $region17: #{tpu_custom_call.1} parent=15 // pred_check
          %p225 = pneg %p66
        $region18: #{tpu_custom_call.1} parent=15 // pred_check_branch
          %227 = sbr.rel (%p225) target = $region20
        $region19: #{tpu_custom_call.1} parent=15 // pred_region
          %s228 = sand.u32 %s56, 1
          %s229 = scalar_lea.sflag [#allocation4], %s228
          %s230 = sand.u32 %s56, 1
          %s231 = smul.addr %s230, 8
          %s232 = scalar_lea.vmem [#allocation3], %s231
          %s233 = smul.u32 2, %s31
          %s235 = ssub.s32 128, 128
          %236 = vsyncadd %s229, %s235
          %s237 = sadd.s32 %s32, %s233
          %s238 = smul.addr %s30, 2
          %s239 = sadd.s32 %s237, %s238
          %s240 = smul.addr %s239, 64
          %s241 = scalar_lea.hbm %s0, %s240
          %s242 = sshll.u32 %s232, 4
          %s243 = int_to_ptr.vmem [resolvable:$true] %s242
          %248 = dma.hbm_to_vmem [thread:$0]  %s241, 128, %s243, %s229, 64, 64, 4
        $region20: #{tpu_custom_call.1} parent=15 // pred_fallthru
          _
        // Predicated region
        $region21: #{tpu_custom_call.1} parent=15 // pred_check
          %p249 = pneg %p94
        $region22: #{tpu_custom_call.1} parent=15 // pred_check_branch
          %251 = sbr.rel (%p249) target = $region24
        $region23: #{tpu_custom_call.1} parent=15 // pred_region
          %s252 = sand.u32 %s23, 1
          %s253 = scalar_lea.sflag [#allocation7], %s252
          %s254 = sand.u32 %s84, 1
          %s255 = smul.addr %s254, 32
          %s256 = scalar_lea.vmem [#allocation6], %s255
          %s257 = smul.u32 8, %s32
          %s259 = ssub.s32 512, 512
          %260 = vsyncadd %s253, %s259
          %s261 = smul.addr %s30, 8
          %s262 = sadd.s32 %s257, %s261
          %s263 = smul.addr %s262, 64
          %s264 = scalar_lea.hbm %s1, %s263
          %s265 = sshll.u32 %s256, 4
          %s266 = int_to_ptr.vmem [resolvable:$true] %s265
          %271 = dma.hbm_to_vmem [thread:$0]  %s264, 512, %s266, %s253, 64, 64, 4
        $region24: #{tpu_custom_call.1} parent=15 // pred_fallthru
          _
        // Predicated region
        $region25: #{tpu_custom_call.1} parent=15 // pred_check
          %p272 = pneg %p120
        $region26: #{tpu_custom_call.1} parent=15 // pred_check_branch
          %274 = sbr.rel (%p272) target = $region28
        $region27: #{tpu_custom_call.1} parent=15 // pred_region
          %s275 = sand.u32 %s23, 1
          %s276 = scalar_lea.sflag [#allocation7], %s275
          %s277 = sand.u32 %s110, 1
          %s278 = scalar_lea.vmem [#allocation8], %s277
          %s280 = ssub.s32 16, 16
          %281 = vsyncadd %s276, %s280
          %s282 = smul.addr %s30, 16
          %s283 = scalar_lea.hbm %s2, %s282
          %s285 = sshll.u32 %s278, 4
          %s286 = int_to_ptr.vmem [resolvable:$true] %s285
          %288 = dma.hbm_to_vmem [thread:$0]  %s283, 16, %s286, %s276
        $region28: #{tpu_custom_call.1} parent=15 // pred_fallthru
          _
        // Predicated region
        $region29: #{tpu_custom_call.1} parent=15 // pred_check
          %p289 = pneg %p146
        $region30: #{tpu_custom_call.1} parent=15 // pred_check_branch
          %291 = sbr.rel (%p289) target = $region32
        $region31: #{tpu_custom_call.1} parent=15 // pred_region
          %s292 = sand.u32 %s23, 1
          %s293 = scalar_lea.sflag [#allocation10], %s292
          %s294 = sand.u32 %s136, 1
          %s295 = smul.addr %s294, 2048
          %s296 = scalar_lea.vmem [#allocation9], %s295
          %s298 = ssub.s32 32768, 32768
          %299 = vsyncadd %s293, %s298
          %s300 = smul.addr %s30, 512
          %s301 = smul.addr %s300, 64
          %s302 = scalar_lea.hbm %s3, %s301
          %s303 = sshll.u32 %s296, 4
          %s304 = int_to_ptr.vmem [resolvable:$true] %s303
          %309 = dma.hbm_to_vmem [thread:$0]  %s302, 32768, %s304, %s293, 2048, 2048, 128
        $region32: #{tpu_custom_call.1} parent=15 // pred_fallthru
          _
        // Predicated region
        $region33: #{tpu_custom_call.1} parent=15 // pred_check
          %p310 = pneg %p172
        $region34: #{tpu_custom_call.1} parent=15 // pred_check_branch
          %312 = sbr.rel (%p310) target = $region36
        $region35: #{tpu_custom_call.1} parent=15 // pred_region
          %s313 = sand.u32 %s23, 1
          %s314 = scalar_lea.sflag [#allocation10], %s313
          %s315 = sand.u32 %s162, 1
          %s316 = smul.addr %s315, 32
          %s317 = scalar_lea.vmem [#allocation11], %s316
          %s319 = ssub.s32 512, 512
          %320 = vsyncadd %s314, %s319
          %s321 = smul.addr %s30, 32
          %s322 = smul.addr %s321, 16
          %s323 = scalar_lea.hbm %s4, %s322
          %s325 = sshll.u32 %s317, 4
          %s326 = int_to_ptr.vmem [resolvable:$true] %s325
          %328 = dma.hbm_to_vmem [thread:$0]  %s323, 512, %s326, %s314
        $region36: #{tpu_custom_call.1} parent=15 // pred_fallthru
          _
      $region16: #{tpu_custom_call.1} parent=5 // pred_fallthru
        _
      %p329 = scmp.le.s32.totalorder 1, %s23
      %p330 = scmp.lt.s32.totalorder %s23, 3
      %p331 = pnand %p329, %p330
      %p332 = pneg %p331
      // Predicated region
      $region37: #{tpu_custom_call.1} parent=5 // pred_check
        _
      $region38: #{tpu_custom_call.1} parent=5 // pred_check_branch
        %334 = sbr.rel (%p331) target = $region40
      $region39: #{tpu_custom_call.1} parent=5 // pred_region
        %s335 = ssub.s32 %s23, 1
        %s336 = sand.u32 %s59, 1
        %s337 = scalar_lea.sflag [#allocation4], %s336
        %s338 = sand.u32 %s59, 1
        %s339 = smul.addr %s338, 8
        %s340 = scalar_lea.vmem [#allocation3], %s339
        // Predicated region
        $region41: #{tpu_custom_call.1} parent=39 // pred_check
          %p341 = pneg %p72
        $region42: #{tpu_custom_call.1} parent=39 // pred_check_branch
          %343 = sbr.rel (%p341) target = $region44
        $region43: #{tpu_custom_call.1} parent=39 // pred_region
          %344 = dma.done %s337, 128
        $region44: #{tpu_custom_call.1} parent=39 // pred_fallthru
          _
        %s345 = sand.u32 %s28, 1
        %s346 = scalar_lea.sflag [#allocation7], %s345
        %s347 = sand.u32 %s87, 1
        %s348 = smul.addr %s347, 32
        %s349 = scalar_lea.vmem [#allocation6], %s348
        // Predicated region
        $region45: #{tpu_custom_call.1} parent=39 // pred_check
          %p350 = pneg %p100
        $region46: #{tpu_custom_call.1} parent=39 // pred_check_branch
          %352 = sbr.rel (%p350) target = $region48
        $region47: #{tpu_custom_call.1} parent=39 // pred_region
          %353 = dma.done %s346, 512
        $region48: #{tpu_custom_call.1} parent=39 // pred_fallthru
          _
        %s354 = sand.u32 %s28, 1
        %s355 = scalar_lea.sflag [#allocation7], %s354
        %s356 = sand.u32 %s113, 1
        %s357 = scalar_lea.vmem [#allocation8], %s356
        // Predicated region
        $region49: #{tpu_custom_call.1} parent=39 // pred_check
          %p358 = pneg %p126
        $region50: #{tpu_custom_call.1} parent=39 // pred_check_branch
          %360 = sbr.rel (%p358) target = $region52
        $region51: #{tpu_custom_call.1} parent=39 // pred_region
          %361 = dma.done %s355, 16
        $region52: #{tpu_custom_call.1} parent=39 // pred_fallthru
          _
        %s362 = sand.u32 %s28, 1
        %s363 = scalar_lea.sflag [#allocation10], %s362
        %s364 = sand.u32 %s139, 1
        %s365 = smul.addr %s364, 2048
        %s366 = scalar_lea.vmem [#allocation9], %s365
        // Predicated region
        $region53: #{tpu_custom_call.1} parent=39 // pred_check
          %p367 = pneg %p152
        $region54: #{tpu_custom_call.1} parent=39 // pred_check_branch
          %369 = sbr.rel (%p367) target = $region56
        $region55: #{tpu_custom_call.1} parent=39 // pred_region
          %370 = dma.done %s363, 32768
        $region56: #{tpu_custom_call.1} parent=39 // pred_fallthru
          _
        %s371 = sand.u32 %s28, 1
        %s372 = scalar_lea.sflag [#allocation10], %s371
        %s373 = sand.u32 %s165, 1
        %s374 = smul.addr %s373, 32
        %s375 = scalar_lea.vmem [#allocation11], %s374
        // Predicated region
        $region57: #{tpu_custom_call.1} parent=39 // pred_check
          %p376 = pneg %p178
        $region58: #{tpu_custom_call.1} parent=39 // pred_check_branch
          %378 = sbr.rel (%p376) target = $region60
        $region59: #{tpu_custom_call.1} parent=39 // pred_region
          %379 = dma.done %s372, 512
        $region60: #{tpu_custom_call.1} parent=39 // pred_fallthru
          _
        %s380 = sand.u32 %s59, 1
        %s381 = scalar_lea.sflag [#allocation4], %s380
        %s382 = sand.u32 %s59, 1
        %s383 = smul.addr %s382, 8
        %s384 = scalar_lea.vmem [#allocation3], %s383
        %p385 = pneg %p72
        %p386 = pneg %p69
        %s387 = sand.u32 %s28, 1
        %s388 = scalar_lea.sflag [#allocation7], %s387
        %s389 = sand.u32 %s87, 1
        %s390 = smul.addr %s389, 32
        %s391 = scalar_lea.vmem [#allocation6], %s390
        %p392 = pneg %p100
        %p393 = pneg %p97
        %s394 = sand.u32 %s28, 1
        %s395 = scalar_lea.sflag [#allocation7], %s394
        %s396 = sand.u32 %s113, 1
        %s397 = scalar_lea.vmem [#allocation8], %s396
        %p398 = pneg %p126
        %p399 = pneg %p123
        %s400 = sand.u32 %s28, 1
        %s401 = scalar_lea.sflag [#allocation10], %s400
        %s402 = sand.u32 %s139, 1
        %s403 = smul.addr %s402, 2048
        %s404 = scalar_lea.vmem [#allocation9], %s403
        %p405 = pneg %p152
        %p406 = pneg %p149
        %s407 = sand.u32 %s28, 1
        %s408 = scalar_lea.sflag [#allocation10], %s407
        %s409 = sand.u32 %s165, 1
        %s410 = smul.addr %s409, 32
        %s411 = scalar_lea.vmem [#allocation11], %s410
        %p412 = pneg %p178
        %p413 = pneg %p175
        %p414 = pneg %p206
        %p415 = pneg %p203
        %s416 = sand.u32 %s193, 1
        %s417 = scalar_lea.sflag [#allocation5], %s416
        %s418 = sand.u32 %s193, 1
        %s419 = smul.addr %s418, 512
        %s420 = scalar_lea.vmem [#allocation12], %s419
        %s421 = smul.u32 2, %s34
        %s422 = smul.u32 8, %s35
        %s423 = smul.u32 2, %s34
        %p425 = scmp.eq.s32.totalorder %s35, 0
        // Predicated region
        $region61: #{tpu_custom_call.1} parent=39 // pred_check
          %p426 = pneg %p425
        $region62: #{tpu_custom_call.1} parent=39 // pred_check_branch
          %428 = sbr.rel (%p426) target = $region64
        $region63: #{tpu_custom_call.1} parent=39 // pred_region
          %429 = vst [vmem:[#allocation2] sm:$0xff] 0.0
          %430 = vst [vmem:[#allocation2 + $0x8] sm:$0xff] 0.0
        $region64: #{tpu_custom_call.1} parent=39 // pred_fallthru
          _
        %v431 = vld [vmem:[#allocation2] sm:$0xff]
        %v432 = vld [vmem:[#allocation2 + $0x8] sm:$0xff]
        %v433 = vld [vmem:[%s340] sm:$0xf]
        %v434 = vld [vmem:[%s340 + $0x4] sm:$0xf]
        %v435 = vld [vmem:[%s349] sm:$0xf]
        %v436 = vld [vmem:[%s349 + $0x4] sm:$0xf]
        %v437 = vld [vmem:[%s349 + $0x8] sm:$0xf]
        %v438 = vld [vmem:[%s349 + $0xc] sm:$0xf]
        %v439 = vld [vmem:[%s349 + $0x10] sm:$0xf]
        %v440 = vld [vmem:[%s349 + $0x14] sm:$0xf]
        %v441 = vld [vmem:[%s349 + $0x18] sm:$0xf]
        %v442 = vld [vmem:[%s349 + $0x1c] sm:$0xf]
        %v445 = vunpack.c.l.b16 %v433
        %v446 = vunpack.c.l.b16 %v434
        %v447 = vpack.c.b16 %v446, %v445
        %v456 = vunpack.c.l.b16 %v435
        %v457 = vunpack.c.l.b16 %v436
        %v458 = vunpack.c.l.b16 %v437
        %v459 = vunpack.c.l.b16 %v438
        %v460 = vunpack.c.l.b16 %v439
        %v461 = vunpack.c.l.b16 %v440
        %v462 = vunpack.c.l.b16 %v441
        %v463 = vunpack.c.l.b16 %v442
        %v464 = vpack.c.b16 %v457, %v456
        %v465 = vpack.c.b16 %v459, %v458
        %v466 = vpack.c.b16 %v461, %v460
        %v467 = vpack.c.b16 %v463, %v462
        %vm472 = vcmask 523264
        %v474 = vsel %vm472, %v447, 0
        %476 = vmatprep.subr.bf16.mxu0 0
        %477 = vmatpush1.bf16.msra.mxu0 %v464
        %478 = vmatprep.subr.bf16.mxu0 0
        %479 = vmatpush1.bf16.msra.mxu0 %v465
        %480 = vmatprep.subr.bf16.mxu0 0
        %481 = vmatpush1.bf16.msra.mxu0 %v466
        %482 = vmatprep.subr.bf16.mxu0 0
        %483 = vmatpush1.bf16.msra.mxu0 %v467
        %484 = vmatprep.subr.bf16.mxu0 0
        %485 = vmatpush1.bf16.msra.mxu0 0
        %486 = vmatprep.subr.bf16.mxu0 0
        %487 = vmatpush1.bf16.msra.mxu0 0
        %488 = vmatprep.subr.bf16.mxu0 0
        %489 = vmatpush1.bf16.msra.mxu0 0
        %490 = vmatprep.subr.bf16.mxu0 0
        %491 = vmatpush1.bf16.msra.mxu0 0
        %492 = vmatprep.subr.bf16.mxu0 0
        %493 = vmatpush1.bf16.msra.mxu0 0
        %494 = vmatprep.subr.bf16.mxu0 0
        %495 = vmatpush1.bf16.msra.mxu0 0
        %496 = vmatprep.subr.bf16.mxu0 0
        %497 = vmatpush1.bf16.msra.mxu0 0
        %498 = vmatprep.subr.bf16.mxu0 0
        %499 = vmatpush1.bf16.msra.mxu0 0
        %500 = vmatprep.subr.bf16.mxu0 0
        %501 = vmatpush1.bf16.msra.mxu0 0
        %502 = vmatprep.subr.bf16.mxu0 0
        %503 = vmatpush1.bf16.msra.mxu0 0
        %504 = vmatprep.subr.bf16.mxu0 0
        %505 = vmatpush1.bf16.msra.mxu0 0
        %506 = vmatprep.subr.bf16.mxu0 0
        %507 = vmatpush1.bf16.msra.mxu0 0
        %508 = vmatprep.mubr.bf16.mxu0 0
        %509 = vmatmul.mubr.bf16.gmra.mrb[0].mxu0 %v474
        %v510 = vpop.f32.mrb[0].mxu0
        %v511 = vadd.f32 0.0, %v510
        %v512 = vpop.f32.mrb[0].mxu0
        %v513 = vpop.f32.mrb[0].mxu0
        %v514 = vadd.f32 0.0, %v513
        %v515 = vpop.f32.mrb[0].mxu0
        %516 = vdwg.mxu0
        %v517 = vadd.f32 %v431, %v511
        %v518 = vadd.f32 %v432, %v514
        %519 = vst [vmem:[#allocation2] sm:$0xff] %v517
        %520 = vst [vmem:[#allocation2 + $0x8] sm:$0xff] %v518
        // Predicated region
        $region65: #{tpu_custom_call.1} parent=39 // pred_check
          %p521 = pneg %p425
        $region66: #{tpu_custom_call.1} parent=39 // pred_check_branch
          %523 = sbr.rel (%p521) target = $region68
        $region67: #{tpu_custom_call.1} parent=39 // pred_region
          %v524 = vld [vmem:[#allocation2] sm:$0xff]
          %v525 = vld [vmem:[#allocation2 + $0x8] sm:$0xff]
          %v526 = vld [vmem:[%s357] sm:$0x1]
          %v528 = vlaneseq
          %v529 = vshrl.u32 %v528, 7
          %v530 = vsub.s32 0, %v529
          %v531 = vrot.slane %v526, %v530
          %v533 = vadd.f32 %v524, %v531
          %v534 = vadd.f32 %v525, %v531
          %v535 = vmax.f32 %v533, 0.0
          %v536 = vmax.f32 %v534, 0.0
          %v537 = vpack.c.bf16 %v536, %v535
          %v538 = vld [vmem:[%s366] sm:$0xff]
          %v539 = vld [vmem:[%s366 + $0x8] sm:$0xff]
          %v540 = vld [vmem:[%s366 + $0x10] sm:$0xff]
          %v541 = vld [vmem:[%s366 + $0x18] sm:$0xff]
          %v542 = vld [vmem:[%s366 + $0x20] sm:$0xff]
          %v543 = vld [vmem:[%s366 + $0x28] sm:$0xff]
          %v544 = vld [vmem:[%s366 + $0x30] sm:$0xff]
          %v545 = vld [vmem:[%s366 + $0x38] sm:$0xff]
          %v546 = vld [vmem:[%s366 + $0x40] sm:$0xff]
          %v547 = vld [vmem:[%s366 + $0x48] sm:$0xff]
          %v548 = vld [vmem:[%s366 + $0x50] sm:$0xff]
          %v549 = vld [vmem:[%s366 + $0x58] sm:$0xff]
          %v550 = vld [vmem:[%s366 + $0x60] sm:$0xff]
          %v551 = vld [vmem:[%s366 + $0x68] sm:$0xff]
          %v552 = vld [vmem:[%s366 + $0x70] sm:$0xff]
          %v553 = vld [vmem:[%s366 + $0x78] sm:$0xff]
          %v554 = vld [vmem:[%s366 + $0x80] sm:$0xff]
          %v555 = vld [vmem:[%s366 + $0x88] sm:$0xff]
          %v556 = vld [vmem:[%s366 + $0x90] sm:$0xff]
          %v557 = vld [vmem:[%s366 + $0x98] sm:$0xff]
          %v558 = vld [vmem:[%s366 + $0xa0] sm:$0xff]
          %v559 = vld [vmem:[%s366 + $0xa8] sm:$0xff]
          %v560 = vld [vmem:[%s366 + $0xb0] sm:$0xff]
          %v561 = vld [vmem:[%s366 + $0xb8] sm:$0xff]
          %v562 = vld [vmem:[%s366 + $0xc0] sm:$0xff]
          %v563 = vld [vmem:[%s366 + $0xc8] sm:$0xff]
          %v564 = vld [vmem:[%s366 + $0xd0] sm:$0xff]
          %v565 = vld [vmem:[%s366 + $0xd8] sm:$0xff]
          %v566 = vld [vmem:[%s366 + $0xe0] sm:$0xff]
          %v567 = vld [vmem:[%s366 + $0xe8] sm:$0xff]
          %v568 = vld [vmem:[%s366 + $0xf0] sm:$0xff]
          %v569 = vld [vmem:[%s366 + $0xf8] sm:$0xff]
          %v570 = vld [vmem:[%s366 + $0x100] sm:$0xff]
          %v571 = vld [vmem:[%s366 + $0x108] sm:$0xff]
          %v572 = vld [vmem:[%s366 + $0x110] sm:$0xff]
          %v573 = vld [vmem:[%s366 + $0x118] sm:$0xff]
          %v574 = vld [vmem:[%s366 + $0x120] sm:$0xff]
          %v575 = vld [vmem:[%s366 + $0x128] sm:$0xff]
          %v576 = vld [vmem:[%s366 + $0x130] sm:$0xff]
          %v577 = vld [vmem:[%s366 + $0x138] sm:$0xff]
          %v578 = vld [vmem:[%s366 + $0x140] sm:$0xff]
          %v579 = vld [vmem:[%s366 + $0x148] sm:$0xff]
          %v580 = vld [vmem:[%s366 + $0x150] sm:$0xff]
          %v581 = vld [vmem:[%s366 + $0x158] sm:$0xff]
          %v582 = vld [vmem:[%s366 + $0x160] sm:$0xff]
          %v583 = vld [vmem:[%s366 + $0x168] sm:$0xff]
          %v584 = vld [vmem:[%s366 + $0x170] sm:$0xff]
          %v585 = vld [vmem:[%s366 + $0x178] sm:$0xff]
          %v586 = vld [vmem:[%s366 + $0x180] sm:$0xff]
          %v587 = vld [vmem:[%s366 + $0x188] sm:$0xff]
          %v588 = vld [vmem:[%s366 + $0x190] sm:$0xff]
          %v589 = vld [vmem:[%s366 + $0x198] sm:$0xff]
          %v590 = vld [vmem:[%s366 + $0x1a0] sm:$0xff]
          %v591 = vld [vmem:[%s366 + $0x1a8] sm:$0xff]
          %v592 = vld [vmem:[%s366 + $0x1b0] sm:$0xff]
          %v593 = vld [vmem:[%s366 + $0x1b8] sm:$0xff]
          %v594 = vld [vmem:[%s366 + $0x1c0] sm:$0xff]
          %v595 = vld [vmem:[%s366 + $0x1c8] sm:$0xff]
          %v596 = vld [vmem:[%s366 + $0x1d0] sm:$0xff]
          %v597 = vld [vmem:[%s366 + $0x1d8] sm:$0xff]
          %v598 = vld [vmem:[%s366 + $0x1e0] sm:$0xff]
          %v599 = vld [vmem:[%s366 + $0x1e8] sm:$0xff]
          %v600 = vld [vmem:[%s366 + $0x1f0] sm:$0xff]
          %v601 = vld [vmem:[%s366 + $0x1f8] sm:$0xff]
          %v602 = vld [vmem:[%s366 + $0x200] sm:$0xff]
          %v603 = vld [vmem:[%s366 + $0x208] sm:$0xff]
          %v604 = vld [vmem:[%s366 + $0x210] sm:$0xff]
          %v605 = vld [vmem:[%s366 + $0x218] sm:$0xff]
          %v606 = vld [vmem:[%s366 + $0x220] sm:$0xff]
          %v607 = vld [vmem:[%s366 + $0x228] sm:$0xff]
          %v608 = vld [vmem:[%s366 + $0x230] sm:$0xff]
          %v609 = vld [vmem:[%s366 + $0x238] sm:$0xff]
          %v610 = vld [vmem:[%s366 + $0x240] sm:$0xff]
          %v611 = vld [vmem:[%s366 + $0x248] sm:$0xff]
          %v612 = vld [vmem:[%s366 + $0x250] sm:$0xff]
          %v613 = vld [vmem:[%s366 + $0x258] sm:$0xff]
          %v614 = vld [vmem:[%s366 + $0x260] sm:$0xff]
          %v615 = vld [vmem:[%s366 + $0x268] sm:$0xff]
          %v616 = vld [vmem:[%s366 + $0x270] sm:$0xff]
          %v617 = vld [vmem:[%s366 + $0x278] sm:$0xff]
          %v618 = vld [vmem:[%s366 + $0x280] sm:$0xff]
          %v619 = vld [vmem:[%s366 + $0x288] sm:$0xff]
          %v620 = vld [vmem:[%s366 + $0x290] sm:$0xff]
          %v621 = vld [vmem:[%s366 + $0x298] sm:$0xff]
          %v622 = vld [vmem:[%s366 + $0x2a0] sm:$0xff]
          %v623 = vld [vmem:[%s366 + $0x2a8] sm:$0xff]
          %v624 = vld [vmem:[%s366 + $0x2b0] sm:$0xff]
          %v625 = vld [vmem:[%s366 + $0x2b8] sm:$0xff]
          %v626 = vld [vmem:[%s366 + $0x2c0] sm:$0xff]
          %v627 = vld [vmem:[%s366 + $0x2c8] sm:$0xff]
          %v628 = vld [vmem:[%s366 + $0x2d0] sm:$0xff]
          %v629 = vld [vmem:[%s366 + $0x2d8] sm:$0xff]
          %v630 = vld [vmem:[%s366 + $0x2e0] sm:$0xff]
          %v631 = vld [vmem:[%s366 + $0x2e8] sm:$0xff]
          %v632 = vld [vmem:[%s366 + $0x2f0] sm:$0xff]
          %v633 = vld [vmem:[%s366 + $0x2f8] sm:$0xff]
          %v634 = vld [vmem:[%s366 + $0x300] sm:$0xff]
          %v635 = vld [vmem:[%s366 + $0x308] sm:$0xff]
          %v636 = vld [vmem:[%s366 + $0x310] sm:$0xff]
          %v637 = vld [vmem:[%s366 + $0x318] sm:$0xff]
          %v638 = vld [vmem:[%s366 + $0x320] sm:$0xff]
          %v639 = vld [vmem:[%s366 + $0x328] sm:$0xff]
          %v640 = vld [vmem:[%s366 + $0x330] sm:$0xff]
          %v641 = vld [vmem:[%s366 + $0x338] sm:$0xff]
          %v642 = vld [vmem:[%s366 + $0x340] sm:$0xff]
          %v643 = vld [vmem:[%s366 + $0x348] sm:$0xff]
          %v644 = vld [vmem:[%s366 + $0x350] sm:$0xff]
          %v645 = vld [vmem:[%s366 + $0x358] sm:$0xff]
          %v646 = vld [vmem:[%s366 + $0x360] sm:$0xff]
          %v647 = vld [vmem:[%s366 + $0x368] sm:$0xff]
          %v648 = vld [vmem:[%s366 + $0x370] sm:$0xff]
          %v649 = vld [vmem:[%s366 + $0x378] sm:$0xff]
          %v650 = vld [vmem:[%s366 + $0x380] sm:$0xff]
          %v651 = vld [vmem:[%s366 + $0x388] sm:$0xff]
          %v652 = vld [vmem:[%s366 + $0x390] sm:$0xff]
          %v653 = vld [vmem:[%s366 + $0x398] sm:$0xff]
          %v654 = vld [vmem:[%s366 + $0x3a0] sm:$0xff]
          %v655 = vld [vmem:[%s366 + $0x3a8] sm:$0xff]
          %v656 = vld [vmem:[%s366 + $0x3b0] sm:$0xff]
          %v657 = vld [vmem:[%s366 + $0x3b8] sm:$0xff]
          %v658 = vld [vmem:[%s366 + $0x3c0] sm:$0xff]
          %v659 = vld [vmem:[%s366 + $0x3c8] sm:$0xff]
          %v660 = vld [vmem:[%s366 + $0x3d0] sm:$0xff]
          %v661 = vld [vmem:[%s366 + $0x3d8] sm:$0xff]
          %v662 = vld [vmem:[%s366 + $0x3e0] sm:$0xff]
          %v663 = vld [vmem:[%s366 + $0x3e8] sm:$0xff]
          %v664 = vld [vmem:[%s366 + $0x3f0] sm:$0xff]
          %v665 = vld [vmem:[%s366 + $0x3f8] sm:$0xff]
          %v666 = vld [vmem:[%s366 + $0x400] sm:$0xff]
          %v667 = vld [vmem:[%s366 + $0x408] sm:$0xff]
          %v668 = vld [vmem:[%s366 + $0x410] sm:$0xff]
          %v669 = vld [vmem:[%s366 + $0x418] sm:$0xff]
          %v670 = vld [vmem:[%s366 + $0x420] sm:$0xff]
          %v671 = vld [vmem:[%s366 + $0x428] sm:$0xff]
          %v672 = vld [vmem:[%s366 + $0x430] sm:$0xff]
          %v673 = vld [vmem:[%s366 + $0x438] sm:$0xff]
          %v674 = vld [vmem:[%s366 + $0x440] sm:$0xff]
          %v675 = vld [vmem:[%s366 + $0x448] sm:$0xff]
          %v676 = vld [vmem:[%s366 + $0x450] sm:$0xff]
          %v677 = vld [vmem:[%s366 + $0x458] sm:$0xff]
          %v678 = vld [vmem:[%s366 + $0x460] sm:$0xff]
          %v679 = vld [vmem:[%s366 + $0x468] sm:$0xff]
          %v680 = vld [vmem:[%s366 + $0x470] sm:$0xff]
          %v681 = vld [vmem:[%s366 + $0x478] sm:$0xff]
          %v682 = vld [vmem:[%s366 + $0x480] sm:$0xff]
          %v683 = vld [vmem:[%s366 + $0x488] sm:$0xff]
          %v684 = vld [vmem:[%s366 + $0x490] sm:$0xff]
          %v685 = vld [vmem:[%s366 + $0x498] sm:$0xff]
          %v686 = vld [vmem:[%s366 + $0x4a0] sm:$0xff]
          %v687 = vld [vmem:[%s366 + $0x4a8] sm:$0xff]
          %v688 = vld [vmem:[%s366 + $0x4b0] sm:$0xff]
          %v689 = vld [vmem:[%s366 + $0x4b8] sm:$0xff]
          %v690 = vld [vmem:[%s366 + $0x4c0] sm:$0xff]
          %v691 = vld [vmem:[%s366 + $0x4c8] sm:$0xff]
          %v692 = vld [vmem:[%s366 + $0x4d0] sm:$0xff]
          %v693 = vld [vmem:[%s366 + $0x4d8] sm:$0xff]
          %v694 = vld [vmem:[%s366 + $0x4e0] sm:$0xff]
          %v695 = vld [vmem:[%s366 + $0x4e8] sm:$0xff]
          %v696 = vld [vmem:[%s366 + $0x4f0] sm:$0xff]
          %v697 = vld [vmem:[%s366 + $0x4f8] sm:$0xff]
          %v698 = vld [vmem:[%s366 + $0x500] sm:$0xff]
          %v699 = vld [vmem:[%s366 + $0x508] sm:$0xff]
          %v700 = vld [vmem:[%s366 + $0x510] sm:$0xff]
          %v701 = vld [vmem:[%s366 + $0x518] sm:$0xff]
          %v702 = vld [vmem:[%s366 + $0x520] sm:$0xff]
          %v703 = vld [vmem:[%s366 + $0x528] sm:$0xff]
          %v704 = vld [vmem:[%s366 + $0x530] sm:$0xff]
          %v705 = vld [vmem:[%s366 + $0x538] sm:$0xff]
          %v706 = vld [vmem:[%s366 + $0x540] sm:$0xff]
          %v707 = vld [vmem:[%s366 + $0x548] sm:$0xff]
          %v708 = vld [vmem:[%s366 + $0x550] sm:$0xff]
          %v709 = vld [vmem:[%s366 + $0x558] sm:$0xff]
          %v710 = vld [vmem:[%s366 + $0x560] sm:$0xff]
          %v711 = vld [vmem:[%s366 + $0x568] sm:$0xff]
          %v712 = vld [vmem:[%s366 + $0x570] sm:$0xff]
          %v713 = vld [vmem:[%s366 + $0x578] sm:$0xff]
          %v714 = vld [vmem:[%s366 + $0x580] sm:$0xff]
          %v715 = vld [vmem:[%s366 + $0x588] sm:$0xff]
          %v716 = vld [vmem:[%s366 + $0x590] sm:$0xff]
          %v717 = vld [vmem:[%s366 + $0x598] sm:$0xff]
          %v718 = vld [vmem:[%s366 + $0x5a0] sm:$0xff]
          %v719 = vld [vmem:[%s366 + $0x5a8] sm:$0xff]
          %v720 = vld [vmem:[%s366 + $0x5b0] sm:$0xff]
          %v721 = vld [vmem:[%s366 + $0x5b8] sm:$0xff]
          %v722 = vld [vmem:[%s366 + $0x5c0] sm:$0xff]
          %v723 = vld [vmem:[%s366 + $0x5c8] sm:$0xff]
          %v724 = vld [vmem:[%s366 + $0x5d0] sm:$0xff]
          %v725 = vld [vmem:[%s366 + $0x5d8] sm:$0xff]
          %v726 = vld [vmem:[%s366 + $0x5e0] sm:$0xff]
          %v727 = vld [vmem:[%s366 + $0x5e8] sm:$0xff]
          %v728 = vld [vmem:[%s366 + $0x5f0] sm:$0xff]
          %v729 = vld [vmem:[%s366 + $0x5f8] sm:$0xff]
          %v730 = vld [vmem:[%s366 + $0x600] sm:$0xff]
          %v731 = vld [vmem:[%s366 + $0x608] sm:$0xff]
          %v732 = vld [vmem:[%s366 + $0x610] sm:$0xff]
          %v733 = vld [vmem:[%s366 + $0x618] sm:$0xff]
          %v734 = vld [vmem:[%s366 + $0x620] sm:$0xff]
          %v735 = vld [vmem:[%s366 + $0x628] sm:$0xff]
          %v736 = vld [vmem:[%s366 + $0x630] sm:$0xff]
          %v737 = vld [vmem:[%s366 + $0x638] sm:$0xff]
          %v738 = vld [vmem:[%s366 + $0x640] sm:$0xff]
          %v739 = vld [vmem:[%s366 + $0x648] sm:$0xff]
          %v740 = vld [vmem:[%s366 + $0x650] sm:$0xff]
          %v741 = vld [vmem:[%s366 + $0x658] sm:$0xff]
          %v742 = vld [vmem:[%s366 + $0x660] sm:$0xff]
          %v743 = vld [vmem:[%s366 + $0x668] sm:$0xff]
          %v744 = vld [vmem:[%s366 + $0x670] sm:$0xff]
          %v745 = vld [vmem:[%s366 + $0x678] sm:$0xff]
          %v746 = vld [vmem:[%s366 + $0x680] sm:$0xff]
          %v747 = vld [vmem:[%s366 + $0x688] sm:$0xff]
          %v748 = vld [vmem:[%s366 + $0x690] sm:$0xff]
          %v749 = vld [vmem:[%s366 + $0x698] sm:$0xff]
          %v750 = vld [vmem:[%s366 + $0x6a0] sm:$0xff]
          %v751 = vld [vmem:[%s366 + $0x6a8] sm:$0xff]
          %v752 = vld [vmem:[%s366 + $0x6b0] sm:$0xff]
          %v753 = vld [vmem:[%s366 + $0x6b8] sm:$0xff]
          %v754 = vld [vmem:[%s366 + $0x6c0] sm:$0xff]
          %v755 = vld [vmem:[%s366 + $0x6c8] sm:$0xff]
          %v756 = vld [vmem:[%s366 + $0x6d0] sm:$0xff]
          %v757 = vld [vmem:[%s366 + $0x6d8] sm:$0xff]
          %v758 = vld [vmem:[%s366 + $0x6e0] sm:$0xff]
          %v759 = vld [vmem:[%s366 + $0x6e8] sm:$0xff]
          %v760 = vld [vmem:[%s366 + $0x6f0] sm:$0xff]
          %v761 = vld [vmem:[%s366 + $0x6f8] sm:$0xff]
          %v762 = vld [vmem:[%s366 + $0x700] sm:$0xff]
          %v763 = vld [vmem:[%s366 + $0x708] sm:$0xff]
          %v764 = vld [vmem:[%s366 + $0x710] sm:$0xff]
          %v765 = vld [vmem:[%s366 + $0x718] sm:$0xff]
          %v766 = vld [vmem:[%s366 + $0x720] sm:$0xff]
          %v767 = vld [vmem:[%s366 + $0x728] sm:$0xff]
          %v768 = vld [vmem:[%s366 + $0x730] sm:$0xff]
          %v769 = vld [vmem:[%s366 + $0x738] sm:$0xff]
          %v770 = vld [vmem:[%s366 + $0x740] sm:$0xff]
          %v771 = vld [vmem:[%s366 + $0x748] sm:$0xff]
          %v772 = vld [vmem:[%s366 + $0x750] sm:$0xff]
          %v773 = vld [vmem:[%s366 + $0x758] sm:$0xff]
          %v774 = vld [vmem:[%s366 + $0x760] sm:$0xff]
          %v775 = vld [vmem:[%s366 + $0x768] sm:$0xff]
          %v776 = vld [vmem:[%s366 + $0x770] sm:$0xff]
          %v777 = vld [vmem:[%s366 + $0x778] sm:$0xff]
          %v778 = vld [vmem:[%s366 + $0x780] sm:$0xff]
          %v779 = vld [vmem:[%s366 + $0x788] sm:$0xff]
          %v780 = vld [vmem:[%s366 + $0x790] sm:$0xff]
          %v781 = vld [vmem:[%s366 + $0x798] sm:$0xff]
          %v782 = vld [vmem:[%s366 + $0x7a0] sm:$0xff]
          %v783 = vld [vmem:[%s366 + $0x7a8] sm:$0xff]
          %v784 = vld [vmem:[%s366 + $0x7b0] sm:$0xff]
          %v785 = vld [vmem:[%s366 + $0x7b8] sm:$0xff]
          %v786 = vld [vmem:[%s366 + $0x7c0] sm:$0xff]
          %v787 = vld [vmem:[%s366 + $0x7c8] sm:$0xff]
          %v788 = vld [vmem:[%s366 + $0x7d0] sm:$0xff]
          %v789 = vld [vmem:[%s366 + $0x7d8] sm:$0xff]
          %v790 = vld [vmem:[%s366 + $0x7e0] sm:$0xff]
          %v791 = vld [vmem:[%s366 + $0x7e8] sm:$0xff]
          %v792 = vld [vmem:[%s366 + $0x7f0] sm:$0xff]
          %v793 = vld [vmem:[%s366 + $0x7f8] sm:$0xff]
          %v794 = vld [vmem:[%s375] sm:$0xff]
          %v795 = vld [vmem:[%s375 + $0x8] sm:$0xff]
          %v796 = vld [vmem:[%s375 + $0x10] sm:$0xff]
          %v797 = vld [vmem:[%s375 + $0x18] sm:$0xff]
          %v802 = vlaneseq
          %v803 = vshrl.u32 %v802, 7
          %v804 = vsub.s32 0, %v803
          %v805 = vrot.slane %v794, %v804
          %v806 = vlaneseq
          %v807 = vshrl.u32 %v806, 7
          %v808 = vsub.s32 1, %v807
          %v809 = vrot.slane %v794, %v808
          %v810 = vlaneseq
          %v811 = vshrl.u32 %v810, 7
          %v812 = vsub.s32 2, %v811
          %v813 = vrot.slane %v794, %v812
          %v814 = vlaneseq
          %v815 = vshrl.u32 %v814, 7
          %v816 = vsub.s32 3, %v815
          %v817 = vrot.slane %v794, %v816
          %v818 = vlaneseq
          %v819 = vshrl.u32 %v818, 7
          %v820 = vsub.s32 4, %v819
          %v821 = vrot.slane %v794, %v820
          %v822 = vlaneseq
          %v823 = vshrl.u32 %v822, 7
          %v824 = vsub.s32 5, %v823
          %v825 = vrot.slane %v794, %v824
          %v826 = vlaneseq
          %v827 = vshrl.u32 %v826, 7
          %v828 = vsub.s32 6, %v827
          %v829 = vrot.slane %v794, %v828
          %v830 = vlaneseq
          %v831 = vshrl.u32 %v830, 7
          %v832 = vsub.s32 7, %v831
          %v833 = vrot.slane %v794, %v832
          %v834 = vlaneseq
          %v835 = vshrl.u32 %v834, 7
          %v836 = vsub.s32 0, %v835
          %v837 = vrot.slane %v795, %v836
          %v838 = vlaneseq
          %v839 = vshrl.u32 %v838, 7
          %v840 = vsub.s32 1, %v839
          %v841 = vrot.slane %v795, %v840
          %v842 = vlaneseq
          %v843 = vshrl.u32 %v842, 7
          %v844 = vsub.s32 2, %v843
          %v845 = vrot.slane %v795, %v844
          %v846 = vlaneseq
          %v847 = vshrl.u32 %v846, 7
          %v848 = vsub.s32 3, %v847
          %v849 = vrot.slane %v795, %v848
          %v850 = vlaneseq
          %v851 = vshrl.u32 %v850, 7
          %v852 = vsub.s32 4, %v851
          %v853 = vrot.slane %v795, %v852
          %v854 = vlaneseq
          %v855 = vshrl.u32 %v854, 7
          %v856 = vsub.s32 5, %v855
          %v857 = vrot.slane %v795, %v856
          %v858 = vlaneseq
          %v859 = vshrl.u32 %v858, 7
          %v860 = vsub.s32 6, %v859
          %v861 = vrot.slane %v795, %v860
          %v862 = vlaneseq
          %v863 = vshrl.u32 %v862, 7
          %v864 = vsub.s32 7, %v863
          %v865 = vrot.slane %v795, %v864
          %v866 = vlaneseq
          %v867 = vshrl.u32 %v866, 7
          %v868 = vsub.s32 0, %v867
          %v869 = vrot.slane %v796, %v868
          %v870 = vlaneseq
          %v871 = vshrl.u32 %v870, 7
          %v872 = vsub.s32 1, %v871
          %v873 = vrot.slane %v796, %v872
          %v874 = vlaneseq
          %v875 = vshrl.u32 %v874, 7
          %v876 = vsub.s32 2, %v875
          %v877 = vrot.slane %v796, %v876
          %v878 = vlaneseq
          %v879 = vshrl.u32 %v878, 7
          %v880 = vsub.s32 3, %v879
          %v881 = vrot.slane %v796, %v880
          %v882 = vlaneseq
          %v883 = vshrl.u32 %v882, 7
          %v884 = vsub.s32 4, %v883
          %v885 = vrot.slane %v796, %v884
          %v886 = vlaneseq
          %v887 = vshrl.u32 %v886, 7
          %v888 = vsub.s32 5, %v887
          %v889 = vrot.slane %v796, %v888
          %v890 = vlaneseq
          %v891 = vshrl.u32 %v890, 7
          %v892 = vsub.s32 6, %v891
          %v893 = vrot.slane %v796, %v892
          %v894 = vlaneseq
          %v895 = vshrl.u32 %v894, 7
          %v896 = vsub.s32 7, %v895
          %v897 = vrot.slane %v796, %v896
          %v898 = vlaneseq
          %v899 = vshrl.u32 %v898, 7
          %v900 = vsub.s32 0, %v899
          %v901 = vrot.slane %v797, %v900
          %v902 = vlaneseq
          %v903 = vshrl.u32 %v902, 7
          %v904 = vsub.s32 1, %v903
          %v905 = vrot.slane %v797, %v904
          %v906 = vlaneseq
          %v907 = vshrl.u32 %v906, 7
          %v908 = vsub.s32 2, %v907
          %v909 = vrot.slane %v797, %v908
          %v910 = vlaneseq
          %v911 = vshrl.u32 %v910, 7
          %v912 = vsub.s32 3, %v911
          %v913 = vrot.slane %v797, %v912
          %v914 = vlaneseq
          %v915 = vshrl.u32 %v914, 7
          %v916 = vsub.s32 4, %v915
          %v917 = vrot.slane %v797, %v916
          %v918 = vlaneseq
          %v919 = vshrl.u32 %v918, 7
          %v920 = vsub.s32 5, %v919
          %v921 = vrot.slane %v797, %v920
          %v922 = vlaneseq
          %v923 = vshrl.u32 %v922, 7
          %v924 = vsub.s32 6, %v923
          %v925 = vrot.slane %v797, %v924
          %v926 = vlaneseq
          %v927 = vshrl.u32 %v926, 7
          %v928 = vsub.s32 7, %v927
          %v929 = vrot.slane %v797, %v928
          %v1218 = vunpack.c.l.b16 %v538
          %v1219 = vunpack.c.h.b16 %v538
          %v1220 = vunpack.c.l.b16 %v539
          %v1221 = vunpack.c.h.b16 %v539
          %v1222 = vunpack.c.l.b16 %v540
          %v1223 = vunpack.c.h.b16 %v540
          %v1224 = vunpack.c.l.b16 %v541
          %v1225 = vunpack.c.h.b16 %v541
          %v1226 = vunpack.c.l.b16 %v542
          %v1227 = vunpack.c.h.b16 %v542
          %v1228 = vunpack.c.l.b16 %v543
          %v1229 = vunpack.c.h.b16 %v543
          %v1230 = vunpack.c.l.b16 %v544
          %v1231 = vunpack.c.h.b16 %v544
          %v1232 = vunpack.c.l.b16 %v545
          %v1233 = vunpack.c.h.b16 %v545
          %v1234 = vunpack.c.l.b16 %v546
          %v1235 = vunpack.c.h.b16 %v546
          %v1236 = vunpack.c.l.b16 %v547
          %v1237 = vunpack.c.h.b16 %v547
          %v1238 = vunpack.c.l.b16 %v548
          %v1239 = vunpack.c.h.b16 %v548
          %v1240 = vunpack.c.l.b16 %v549
          %v1241 = vunpack.c.h.b16 %v549
          %v1242 = vunpack.c.l.b16 %v550
          %v1243 = vunpack.c.h.b16 %v550
          %v1244 = vunpack.c.l.b16 %v551
          %v1245 = vunpack.c.h.b16 %v551
          %v1246 = vunpack.c.l.b16 %v552
          %v1247 = vunpack.c.h.b16 %v552
          %v1248 = vunpack.c.l.b16 %v553
          %v1249 = vunpack.c.h.b16 %v553
          %v1250 = vunpack.c.l.b16 %v554
          %v1251 = vunpack.c.h.b16 %v554
          %v1252 = vunpack.c.l.b16 %v555
          %v1253 = vunpack.c.h.b16 %v555
          %v1254 = vunpack.c.l.b16 %v556
          %v1255 = vunpack.c.h.b16 %v556
          %v1256 = vunpack.c.l.b16 %v557
          %v1257 = vunpack.c.h.b16 %v557
          %v1258 = vunpack.c.l.b16 %v558
          %v1259 = vunpack.c.h.b16 %v558
          %v1260 = vunpack.c.l.b16 %v559
          %v1261 = vunpack.c.h.b16 %v559
          %v1262 = vunpack.c.l.b16 %v560
          %v1263 = vunpack.c.h.b16 %v560
          %v1264 = vunpack.c.l.b16 %v561
          %v1265 = vunpack.c.h.b16 %v561
          %v1266 = vunpack.c.l.b16 %v562
          %v1267 = vunpack.c.h.b16 %v562
          %v1268 = vunpack.c.l.b16 %v563
          %v1269 = vunpack.c.h.b16 %v563
          %v1270 = vunpack.c.l.b16 %v564
          %v1271 = vunpack.c.h.b16 %v564
          %v1272 = vunpack.c.l.b16 %v565
          %v1273 = vunpack.c.h.b16 %v565
          %v1274 = vunpack.c.l.b16 %v566
          %v1275 = vunpack.c.h.b16 %v566
          %v1276 = vunpack.c.l.b16 %v567
          %v1277 = vunpack.c.h.b16 %v567
          %v1278 = vunpack.c.l.b16 %v568
          %v1279 = vunpack.c.h.b16 %v568
          %v1280 = vunpack.c.l.b16 %v569
          %v1281 = vunpack.c.h.b16 %v569
          %v1282 = vunpack.c.l.b16 %v570
          %v1283 = vunpack.c.h.b16 %v570
          %v1284 = vunpack.c.l.b16 %v571
          %v1285 = vunpack.c.h.b16 %v571
          %v1286 = vunpack.c.l.b16 %v572
          %v1287 = vunpack.c.h.b16 %v572
          %v1288 = vunpack.c.l.b16 %v573
          %v1289 = vunpack.c.h.b16 %v573
          %v1290 = vunpack.c.l.b16 %v574
          %v1291 = vunpack.c.h.b16 %v574
          %v1292 = vunpack.c.l.b16 %v575
          %v1293 = vunpack.c.h.b16 %v575
          %v1294 = vunpack.c.l.b16 %v576
          %v1295 = vunpack.c.h.b16 %v576
          %v1296 = vunpack.c.l.b16 %v577
          %v1297 = vunpack.c.h.b16 %v577
          %v1298 = vunpack.c.l.b16 %v578
          %v1299 = vunpack.c.h.b16 %v578
          %v1300 = vunpack.c.l.b16 %v579
          %v1301 = vunpack.c.h.b16 %v579
          %v1302 = vunpack.c.l.b16 %v580
          %v1303 = vunpack.c.h.b16 %v580
          %v1304 = vunpack.c.l.b16 %v581
          %v1305 = vunpack.c.h.b16 %v581
          %v1306 = vunpack.c.l.b16 %v582
          %v1307 = vunpack.c.h.b16 %v582
          %v1308 = vunpack.c.l.b16 %v583
          %v1309 = vunpack.c.h.b16 %v583
          %v1310 = vunpack.c.l.b16 %v584
          %v1311 = vunpack.c.h.b16 %v584
          %v1312 = vunpack.c.l.b16 %v585
          %v1313 = vunpack.c.h.b16 %v585
          %v1314 = vunpack.c.l.b16 %v586
          %v1315 = vunpack.c.h.b16 %v586
          %v1316 = vunpack.c.l.b16 %v587
          %v1317 = vunpack.c.h.b16 %v587
          %v1318 = vunpack.c.l.b16 %v588
          %v1319 = vunpack.c.h.b16 %v588
          %v1320 = vunpack.c.l.b16 %v589
          %v1321 = vunpack.c.h.b16 %v589
          %v1322 = vunpack.c.l.b16 %v590
          %v1323 = vunpack.c.h.b16 %v590
          %v1324 = vunpack.c.l.b16 %v591
          %v1325 = vunpack.c.h.b16 %v591
          %v1326 = vunpack.c.l.b16 %v592
          %v1327 = vunpack.c.h.b16 %v592
          %v1328 = vunpack.c.l.b16 %v593
          %v1329 = vunpack.c.h.b16 %v593
          %v1330 = vunpack.c.l.b16 %v594
          %v1331 = vunpack.c.h.b16 %v594
          %v1332 = vunpack.c.l.b16 %v595
          %v1333 = vunpack.c.h.b16 %v595
          %v1334 = vunpack.c.l.b16 %v596
          %v1335 = vunpack.c.h.b16 %v596
          %v1336 = vunpack.c.l.b16 %v597
          %v1337 = vunpack.c.h.b16 %v597
          %v1338 = vunpack.c.l.b16 %v598
          %v1339 = vunpack.c.h.b16 %v598
          %v1340 = vunpack.c.l.b16 %v599
          %v1341 = vunpack.c.h.b16 %v599
          %v1342 = vunpack.c.l.b16 %v600
          %v1343 = vunpack.c.h.b16 %v600
          %v1344 = vunpack.c.l.b16 %v601
          %v1345 = vunpack.c.h.b16 %v601
          %v1346 = vunpack.c.l.b16 %v602
          %v1347 = vunpack.c.h.b16 %v602
          %v1348 = vunpack.c.l.b16 %v603
          %v1349 = vunpack.c.h.b16 %v603
          %v1350 = vunpack.c.l.b16 %v604
          %v1351 = vunpack.c.h.b16 %v604
          %v1352 = vunpack.c.l.b16 %v605
          %v1353 = vunpack.c.h.b16 %v605
          %v1354 = vunpack.c.l.b16 %v606
          %v1355 = vunpack.c.h.b16 %v606
          %v1356 = vunpack.c.l.b16 %v607
          %v1357 = vunpack.c.h.b16 %v607
          %v1358 = vunpack.c.l.b16 %v608
          %v1359 = vunpack.c.h.b16 %v608
          %v1360 = vunpack.c.l.b16 %v609
          %v1361 = vunpack.c.h.b16 %v609
          %v1362 = vunpack.c.l.b16 %v610
          %v1363 = vunpack.c.h.b16 %v610
          %v1364 = vunpack.c.l.b16 %v611
          %v1365 = vunpack.c.h.b16 %v611
          %v1366 = vunpack.c.l.b16 %v612
          %v1367 = vunpack.c.h.b16 %v612
          %v1368 = vunpack.c.l.b16 %v613
          %v1369 = vunpack.c.h.b16 %v613
          %v1370 = vunpack.c.l.b16 %v614
          %v1371 = vunpack.c.h.b16 %v614
          %v1372 = vunpack.c.l.b16 %v615
          %v1373 = vunpack.c.h.b16 %v615
          %v1374 = vunpack.c.l.b16 %v616
          %v1375 = vunpack.c.h.b16 %v616
          %v1376 = vunpack.c.l.b16 %v617
          %v1377 = vunpack.c.h.b16 %v617
          %v1378 = vunpack.c.l.b16 %v618
          %v1379 = vunpack.c.h.b16 %v618
          %v1380 = vunpack.c.l.b16 %v619
          %v1381 = vunpack.c.h.b16 %v619
          %v1382 = vunpack.c.l.b16 %v620
          %v1383 = vunpack.c.h.b16 %v620
          %v1384 = vunpack.c.l.b16 %v621
          %v1385 = vunpack.c.h.b16 %v621
          %v1386 = vunpack.c.l.b16 %v622
          %v1387 = vunpack.c.h.b16 %v622
          %v1388 = vunpack.c.l.b16 %v623
          %v1389 = vunpack.c.h.b16 %v623
          %v1390 = vunpack.c.l.b16 %v624
          %v1391 = vunpack.c.h.b16 %v624
          %v1392 = vunpack.c.l.b16 %v625
          %v1393 = vunpack.c.h.b16 %v625
          %v1394 = vunpack.c.l.b16 %v626
          %v1395 = vunpack.c.h.b16 %v626
          %v1396 = vunpack.c.l.b16 %v627
          %v1397 = vunpack.c.h.b16 %v627
          %v1398 = vunpack.c.l.b16 %v628
          %v1399 = vunpack.c.h.b16 %v628
          %v1400 = vunpack.c.l.b16 %v629
          %v1401 = vunpack.c.h.b16 %v629
          %v1402 = vunpack.c.l.b16 %v630
          %v1403 = vunpack.c.h.b16 %v630
          %v1404 = vunpack.c.l.b16 %v631
          %v1405 = vunpack.c.h.b16 %v631
          %v1406 = vunpack.c.l.b16 %v632
          %v1407 = vunpack.c.h.b16 %v632
          %v1408 = vunpack.c.l.b16 %v633
          %v1409 = vunpack.c.h.b16 %v633
          %v1410 = vunpack.c.l.b16 %v634
          %v1411 = vunpack.c.h.b16 %v634
          %v1412 = vunpack.c.l.b16 %v635
          %v1413 = vunpack.c.h.b16 %v635
          %v1414 = vunpack.c.l.b16 %v636
          %v1415 = vunpack.c.h.b16 %v636
          %v1416 = vunpack.c.l.b16 %v637
          %v1417 = vunpack.c.h.b16 %v637
          %v1418 = vunpack.c.l.b16 %v638
          %v1419 = vunpack.c.h.b16 %v638
          %v1420 = vunpack.c.l.b16 %v639
          %v1421 = vunpack.c.h.b16 %v639
          %v1422 = vunpack.c.l.b16 %v640
          %v1423 = vunpack.c.h.b16 %v640
          %v1424 = vunpack.c.l.b16 %v641
          %v1425 = vunpack.c.h.b16 %v641
          %v1426 = vunpack.c.l.b16 %v642
          %v1427 = vunpack.c.h.b16 %v642
          %v1428 = vunpack.c.l.b16 %v643
          %v1429 = vunpack.c.h.b16 %v643
          %v1430 = vunpack.c.l.b16 %v644
          %v1431 = vunpack.c.h.b16 %v644
          %v1432 = vunpack.c.l.b16 %v645
          %v1433 = vunpack.c.h.b16 %v645
          %v1434 = vunpack.c.l.b16 %v646
          %v1435 = vunpack.c.h.b16 %v646
          %v1436 = vunpack.c.l.b16 %v647
          %v1437 = vunpack.c.h.b16 %v647
          %v1438 = vunpack.c.l.b16 %v648
          %v1439 = vunpack.c.h.b16 %v648
          %v1440 = vunpack.c.l.b16 %v649
          %v1441 = vunpack.c.h.b16 %v649
          %v1442 = vunpack.c.l.b16 %v650
          %v1443 = vunpack.c.h.b16 %v650
          %v1444 = vunpack.c.l.b16 %v651
          %v1445 = vunpack.c.h.b16 %v651
          %v1446 = vunpack.c.l.b16 %v652
          %v1447 = vunpack.c.h.b16 %v652
          %v1448 = vunpack.c.l.b16 %v653
          %v1449 = vunpack.c.h.b16 %v653
          %v1450 = vunpack.c.l.b16 %v654
          %v1451 = vunpack.c.h.b16 %v654
          %v1452 = vunpack.c.l.b16 %v655
          %v1453 = vunpack.c.h.b16 %v655
          %v1454 = vunpack.c.l.b16 %v656
          %v1455 = vunpack.c.h.b16 %v656
          %v1456 = vunpack.c.l.b16 %v657
          %v1457 = vunpack.c.h.b16 %v657
          %v1458 = vunpack.c.l.b16 %v658
          %v1459 = vunpack.c.h.b16 %v658
          %v1460 = vunpack.c.l.b16 %v659
          %v1461 = vunpack.c.h.b16 %v659
          %v1462 = vunpack.c.l.b16 %v660
          %v1463 = vunpack.c.h.b16 %v660
          %v1464 = vunpack.c.l.b16 %v661
          %v1465 = vunpack.c.h.b16 %v661
          %v1466 = vunpack.c.l.b16 %v662
          %v1467 = vunpack.c.h.b16 %v662
          %v1468 = vunpack.c.l.b16 %v663
          %v1469 = vunpack.c.h.b16 %v663
          %v1470 = vunpack.c.l.b16 %v664
          %v1471 = vunpack.c.h.b16 %v664
          %v1472 = vunpack.c.l.b16 %v665
          %v1473 = vunpack.c.h.b16 %v665
          %v1474 = vunpack.c.l.b16 %v666
          %v1475 = vunpack.c.h.b16 %v666
          %v1476 = vunpack.c.l.b16 %v667
          %v1477 = vunpack.c.h.b16 %v667
          %v1478 = vunpack.c.l.b16 %v668
          %v1479 = vunpack.c.h.b16 %v668
          %v1480 = vunpack.c.l.b16 %v669
          %v1481 = vunpack.c.h.b16 %v669
          %v1482 = vunpack.c.l.b16 %v670
          %v1483 = vunpack.c.h.b16 %v670
          %v1484 = vunpack.c.l.b16 %v671
          %v1485 = vunpack.c.h.b16 %v671
          %v1486 = vunpack.c.l.b16 %v672
          %v1487 = vunpack.c.h.b16 %v672
          %v1488 = vunpack.c.l.b16 %v673
          %v1489 = vunpack.c.h.b16 %v673
          %v1490 = vunpack.c.l.b16 %v674
          %v1491 = vunpack.c.h.b16 %v674
          %v1492 = vunpack.c.l.b16 %v675
          %v1493 = vunpack.c.h.b16 %v675
          %v1494 = vunpack.c.l.b16 %v676
          %v1495 = vunpack.c.h.b16 %v676
          %v1496 = vunpack.c.l.b16 %v677
          %v1497 = vunpack.c.h.b16 %v677
          %v1498 = vunpack.c.l.b16 %v678
          %v1499 = vunpack.c.h.b16 %v678
          %v1500 = vunpack.c.l.b16 %v679
          %v1501 = vunpack.c.h.b16 %v679
          %v1502 = vunpack.c.l.b16 %v680
          %v1503 = vunpack.c.h.b16 %v680
          %v1504 = vunpack.c.l.b16 %v681
          %v1505 = vunpack.c.h.b16 %v681
          %v1506 = vunpack.c.l.b16 %v682
          %v1507 = vunpack.c.h.b16 %v682
          %v1508 = vunpack.c.l.b16 %v683
          %v1509 = vunpack.c.h.b16 %v683
          %v1510 = vunpack.c.l.b16 %v684
          %v1511 = vunpack.c.h.b16 %v684
          %v1512 = vunpack.c.l.b16 %v685
          %v1513 = vunpack.c.h.b16 %v685
          %v1514 = vunpack.c.l.b16 %v686
          %v1515 = vunpack.c.h.b16 %v686
          %v1516 = vunpack.c.l.b16 %v687
          %v1517 = vunpack.c.h.b16 %v687
          %v1518 = vunpack.c.l.b16 %v688
          %v1519 = vunpack.c.h.b16 %v688
          %v1520 = vunpack.c.l.b16 %v689
          %v1521 = vunpack.c.h.b16 %v689
          %v1522 = vunpack.c.l.b16 %v690
          %v1523 = vunpack.c.h.b16 %v690
          %v1524 = vunpack.c.l.b16 %v691
          %v1525 = vunpack.c.h.b16 %v691
          %v1526 = vunpack.c.l.b16 %v692
          %v1527 = vunpack.c.h.b16 %v692
          %v1528 = vunpack.c.l.b16 %v693
          %v1529 = vunpack.c.h.b16 %v693
          %v1530 = vunpack.c.l.b16 %v694
          %v1531 = vunpack.c.h.b16 %v694
          %v1532 = vunpack.c.l.b16 %v695
          %v1533 = vunpack.c.h.b16 %v695
          %v1534 = vunpack.c.l.b16 %v696
          %v1535 = vunpack.c.h.b16 %v696
          %v1536 = vunpack.c.l.b16 %v697
          %v1537 = vunpack.c.h.b16 %v697
          %v1538 = vunpack.c.l.b16 %v698
          %v1539 = vunpack.c.h.b16 %v698
          %v1540 = vunpack.c.l.b16 %v699
          %v1541 = vunpack.c.h.b16 %v699
          %v1542 = vunpack.c.l.b16 %v700
          %v1543 = vunpack.c.h.b16 %v700
          %v1544 = vunpack.c.l.b16 %v701
          %v1545 = vunpack.c.h.b16 %v701
          %v1546 = vunpack.c.l.b16 %v702
          %v1547 = vunpack.c.h.b16 %v702
          %v1548 = vunpack.c.l.b16 %v703
          %v1549 = vunpack.c.h.b16 %v703
          %v1550 = vunpack.c.l.b16 %v704
          %v1551 = vunpack.c.h.b16 %v704
          %v1552 = vunpack.c.l.b16 %v705
          %v1553 = vunpack.c.h.b16 %v705
          %v1554 = vunpack.c.l.b16 %v706
          %v1555 = vunpack.c.h.b16 %v706
          %v1556 = vunpack.c.l.b16 %v707
          %v1557 = vunpack.c.h.b16 %v707
          %v1558 = vunpack.c.l.b16 %v708
          %v1559 = vunpack.c.h.b16 %v708
          %v1560 = vunpack.c.l.b16 %v709
          %v1561 = vunpack.c.h.b16 %v709
          %v1562 = vunpack.c.l.b16 %v710
          %v1563 = vunpack.c.h.b16 %v710
          %v1564 = vunpack.c.l.b16 %v711
          %v1565 = vunpack.c.h.b16 %v711
          %v1566 = vunpack.c.l.b16 %v712
          %v1567 = vunpack.c.h.b16 %v712
          %v1568 = vunpack.c.l.b16 %v713
          %v1569 = vunpack.c.h.b16 %v713
          %v1570 = vunpack.c.l.b16 %v714
          %v1571 = vunpack.c.h.b16 %v714
          %v1572 = vunpack.c.l.b16 %v715
          %v1573 = vunpack.c.h.b16 %v715
          %v1574 = vunpack.c.l.b16 %v716
          %v1575 = vunpack.c.h.b16 %v716
          %v1576 = vunpack.c.l.b16 %v717
          %v1577 = vunpack.c.h.b16 %v717
          %v1578 = vunpack.c.l.b16 %v718
          %v1579 = vunpack.c.h.b16 %v718
          %v1580 = vunpack.c.l.b16 %v719
          %v1581 = vunpack.c.h.b16 %v719
          %v1582 = vunpack.c.l.b16 %v720
          %v1583 = vunpack.c.h.b16 %v720
          %v1584 = vunpack.c.l.b16 %v721
          %v1585 = vunpack.c.h.b16 %v721
          %v1586 = vunpack.c.l.b16 %v722
          %v1587 = vunpack.c.h.b16 %v722
          %v1588 = vunpack.c.l.b16 %v723
          %v1589 = vunpack.c.h.b16 %v723
          %v1590 = vunpack.c.l.b16 %v724
          %v1591 = vunpack.c.h.b16 %v724
          %v1592 = vunpack.c.l.b16 %v725
          %v1593 = vunpack.c.h.b16 %v725
          %v1594 = vunpack.c.l.b16 %v726
          %v1595 = vunpack.c.h.b16 %v726
          %v1596 = vunpack.c.l.b16 %v727
          %v1597 = vunpack.c.h.b16 %v727
          %v1598 = vunpack.c.l.b16 %v728
          %v1599 = vunpack.c.h.b16 %v728
          %v1600 = vunpack.c.l.b16 %v729
          %v1601 = vunpack.c.h.b16 %v729
          %v1602 = vunpack.c.l.b16 %v730
          %v1603 = vunpack.c.h.b16 %v730
          %v1604 = vunpack.c.l.b16 %v731
          %v1605 = vunpack.c.h.b16 %v731
          %v1606 = vunpack.c.l.b16 %v732
          %v1607 = vunpack.c.h.b16 %v732
          %v1608 = vunpack.c.l.b16 %v733
          %v1609 = vunpack.c.h.b16 %v733
          %v1610 = vunpack.c.l.b16 %v734
          %v1611 = vunpack.c.h.b16 %v734
          %v1612 = vunpack.c.l.b16 %v735
          %v1613 = vunpack.c.h.b16 %v735
          %v1614 = vunpack.c.l.b16 %v736
          %v1615 = vunpack.c.h.b16 %v736
          %v1616 = vunpack.c.l.b16 %v737
          %v1617 = vunpack.c.h.b16 %v737
          %v1618 = vunpack.c.l.b16 %v738
          %v1619 = vunpack.c.h.b16 %v738
          %v1620 = vunpack.c.l.b16 %v739
          %v1621 = vunpack.c.h.b16 %v739
          %v1622 = vunpack.c.l.b16 %v740
          %v1623 = vunpack.c.h.b16 %v740
          %v1624 = vunpack.c.l.b16 %v741
          %v1625 = vunpack.c.h.b16 %v741
          %v1626 = vunpack.c.l.b16 %v742
          %v1627 = vunpack.c.h.b16 %v742
          %v1628 = vunpack.c.l.b16 %v743
          %v1629 = vunpack.c.h.b16 %v743
          %v1630 = vunpack.c.l.b16 %v744
          %v1631 = vunpack.c.h.b16 %v744
          %v1632 = vunpack.c.l.b16 %v745
          %v1633 = vunpack.c.h.b16 %v745
          %v1634 = vunpack.c.l.b16 %v746
          %v1635 = vunpack.c.h.b16 %v746
          %v1636 = vunpack.c.l.b16 %v747
          %v1637 = vunpack.c.h.b16 %v747
          %v1638 = vunpack.c.l.b16 %v748
          %v1639 = vunpack.c.h.b16 %v748
          %v1640 = vunpack.c.l.b16 %v749
          %v1641 = vunpack.c.h.b16 %v749
          %v1642 = vunpack.c.l.b16 %v750
          %v1643 = vunpack.c.h.b16 %v750
          %v1644 = vunpack.c.l.b16 %v751
          %v1645 = vunpack.c.h.b16 %v751
          %v1646 = vunpack.c.l.b16 %v752
          %v1647 = vunpack.c.h.b16 %v752
          %v1648 = vunpack.c.l.b16 %v753
          %v1649 = vunpack.c.h.b16 %v753
          %v1650 = vunpack.c.l.b16 %v754
          %v1651 = vunpack.c.h.b16 %v754
          %v1652 = vunpack.c.l.b16 %v755
          %v1653 = vunpack.c.h.b16 %v755
          %v1654 = vunpack.c.l.b16 %v756
          %v1655 = vunpack.c.h.b16 %v756
          %v1656 = vunpack.c.l.b16 %v757
          %v1657 = vunpack.c.h.b16 %v757
          %v1658 = vunpack.c.l.b16 %v758
          %v1659 = vunpack.c.h.b16 %v758
          %v1660 = vunpack.c.l.b16 %v759
          %v1661 = vunpack.c.h.b16 %v759
          %v1662 = vunpack.c.l.b16 %v760
          %v1663 = vunpack.c.h.b16 %v760
          %v1664 = vunpack.c.l.b16 %v761
          %v1665 = vunpack.c.h.b16 %v761
          %v1666 = vunpack.c.l.b16 %v762
          %v1667 = vunpack.c.h.b16 %v762
          %v1668 = vunpack.c.l.b16 %v763
          %v1669 = vunpack.c.h.b16 %v763
          %v1670 = vunpack.c.l.b16 %v764
          %v1671 = vunpack.c.h.b16 %v764
          %v1672 = vunpack.c.l.b16 %v765
          %v1673 = vunpack.c.h.b16 %v765
          %v1674 = vunpack.c.l.b16 %v766
          %v1675 = vunpack.c.h.b16 %v766
          %v1676 = vunpack.c.l.b16 %v767
          %v1677 = vunpack.c.h.b16 %v767
          %v1678 = vunpack.c.l.b16 %v768
          %v1679 = vunpack.c.h.b16 %v768
          %v1680 = vunpack.c.l.b16 %v769
          %v1681 = vunpack.c.h.b16 %v769
          %v1682 = vunpack.c.l.b16 %v770
          %v1683 = vunpack.c.h.b16 %v770
          %v1684 = vunpack.c.l.b16 %v771
          %v1685 = vunpack.c.h.b16 %v771
          %v1686 = vunpack.c.l.b16 %v772
          %v1687 = vunpack.c.h.b16 %v772
          %v1688 = vunpack.c.l.b16 %v773
          %v1689 = vunpack.c.h.b16 %v773
          %v1690 = vunpack.c.l.b16 %v774
          %v1691 = vunpack.c.h.b16 %v774
          %v1692 = vunpack.c.l.b16 %v775
          %v1693 = vunpack.c.h.b16 %v775
          %v1694 = vunpack.c.l.b16 %v776
          %v1695 = vunpack.c.h.b16 %v776
          %v1696 = vunpack.c.l.b16 %v777
          %v1697 = vunpack.c.h.b16 %v777
          %v1698 = vunpack.c.l.b16 %v778
          %v1699 = vunpack.c.h.b16 %v778
          %v1700 = vunpack.c.l.b16 %v779
          %v1701 = vunpack.c.h.b16 %v779
          %v1702 = vunpack.c.l.b16 %v780
          %v1703 = vunpack.c.h.b16 %v780
          %v1704 = vunpack.c.l.b16 %v781
          %v1705 = vunpack.c.h.b16 %v781
          %v1706 = vunpack.c.l.b16 %v782
          %v1707 = vunpack.c.h.b16 %v782
          %v1708 = vunpack.c.l.b16 %v783
          %v1709 = vunpack.c.h.b16 %v783
          %v1710 = vunpack.c.l.b16 %v784
          %v1711 = vunpack.c.h.b16 %v784
          %v1712 = vunpack.c.l.b16 %v785
          %v1713 = vunpack.c.h.b16 %v785
          %v1714 = vunpack.c.l.b16 %v786
          %v1715 = vunpack.c.h.b16 %v786
          %v1716 = vunpack.c.l.b16 %v787
          %v1717 = vunpack.c.h.b16 %v787
          %v1718 = vunpack.c.l.b16 %v788
          %v1719 = vunpack.c.h.b16 %v788
          %v1720 = vunpack.c.l.b16 %v789
          %v1721 = vunpack.c.h.b16 %v789
          %v1722 = vunpack.c.l.b16 %v790
          %v1723 = vunpack.c.h.b16 %v790
          %v1724 = vunpack.c.l.b16 %v791
          %v1725 = vunpack.c.h.b16 %v791
          %v1726 = vunpack.c.l.b16 %v792
          %v1727 = vunpack.c.h.b16 %v792
          %v1728 = vunpack.c.l.b16 %v793
          %v1729 = vunpack.c.h.b16 %v793
          %v1730 = vpack.c.b16 %v1250, %v1218
          %v1731 = vpack.c.b16 %v1251, %v1219
          %v1732 = vpack.c.b16 %v1252, %v1220
          %v1733 = vpack.c.b16 %v1253, %v1221
          %v1734 = vpack.c.b16 %v1254, %v1222
          %v1735 = vpack.c.b16 %v1255, %v1223
          %v1736 = vpack.c.b16 %v1256, %v1224
          %v1737 = vpack.c.b16 %v1257, %v1225
          %v1738 = vpack.c.b16 %v1258, %v1226
          %v1739 = vpack.c.b16 %v1259, %v1227
          %v1740 = vpack.c.b16 %v1260, %v1228
          %v1741 = vpack.c.b16 %v1261, %v1229
          %v1742 = vpack.c.b16 %v1262, %v1230
          %v1743 = vpack.c.b16 %v1263, %v1231
          %v1744 = vpack.c.b16 %v1264, %v1232
          %v1745 = vpack.c.b16 %v1265, %v1233
          %v1746 = vpack.c.b16 %v1266, %v1234
          %v1747 = vpack.c.b16 %v1267, %v1235
          %v1748 = vpack.c.b16 %v1268, %v1236
          %v1749 = vpack.c.b16 %v1269, %v1237
          %v1750 = vpack.c.b16 %v1270, %v1238
          %v1751 = vpack.c.b16 %v1271, %v1239
          %v1752 = vpack.c.b16 %v1272, %v1240
          %v1753 = vpack.c.b16 %v1273, %v1241
          %v1754 = vpack.c.b16 %v1274, %v1242
          %v1755 = vpack.c.b16 %v1275, %v1243
          %v1756 = vpack.c.b16 %v1276, %v1244
          %v1757 = vpack.c.b16 %v1277, %v1245
          %v1758 = vpack.c.b16 %v1278, %v1246
          %v1759 = vpack.c.b16 %v1279, %v1247
          %v1760 = vpack.c.b16 %v1280, %v1248
          %v1761 = vpack.c.b16 %v1281, %v1249
          %v1762 = vpack.c.b16 %v1314, %v1282
          %v1763 = vpack.c.b16 %v1315, %v1283
          %v1764 = vpack.c.b16 %v1316, %v1284
          %v1765 = vpack.c.b16 %v1317, %v1285
          %v1766 = vpack.c.b16 %v1318, %v1286
          %v1767 = vpack.c.b16 %v1319, %v1287
          %v1768 = vpack.c.b16 %v1320, %v1288
          %v1769 = vpack.c.b16 %v1321, %v1289
          %v1770 = vpack.c.b16 %v1322, %v1290
          %v1771 = vpack.c.b16 %v1323, %v1291
          %v1772 = vpack.c.b16 %v1324, %v1292
          %v1773 = vpack.c.b16 %v1325, %v1293
          %v1774 = vpack.c.b16 %v1326, %v1294
          %v1775 = vpack.c.b16 %v1327, %v1295
          %v1776 = vpack.c.b16 %v1328, %v1296
          %v1777 = vpack.c.b16 %v1329, %v1297
          %v1778 = vpack.c.b16 %v1330, %v1298
          %v1779 = vpack.c.b16 %v1331, %v1299
          %v1780 = vpack.c.b16 %v1332, %v1300
          %v1781 = vpack.c.b16 %v1333, %v1301
          %v1782 = vpack.c.b16 %v1334, %v1302
          %v1783 = vpack.c.b16 %v1335, %v1303
          %v1784 = vpack.c.b16 %v1336, %v1304
          %v1785 = vpack.c.b16 %v1337, %v1305
          %v1786 = vpack.c.b16 %v1338, %v1306
          %v1787 = vpack.c.b16 %v1339, %v1307
          %v1788 = vpack.c.b16 %v1340, %v1308
          %v1789 = vpack.c.b16 %v1341, %v1309
          %v1790 = vpack.c.b16 %v1342, %v1310
          %v1791 = vpack.c.b16 %v1343, %v1311
          %v1792 = vpack.c.b16 %v1344, %v1312
          %v1793 = vpack.c.b16 %v1345, %v1313
          %v1794 = vpack.c.b16 %v1378, %v1346
          %v1795 = vpack.c.b16 %v1379, %v1347
          %v1796 = vpack.c.b16 %v1380, %v1348
          %v1797 = vpack.c.b16 %v1381, %v1349
          %v1798 = vpack.c.b16 %v1382, %v1350
          %v1799 = vpack.c.b16 %v1383, %v1351
          %v1800 = vpack.c.b16 %v1384, %v1352
          %v1801 = vpack.c.b16 %v1385, %v1353
          %v1802 = vpack.c.b16 %v1386, %v1354
          %v1803 = vpack.c.b16 %v1387, %v1355
          %v1804 = vpack.c.b16 %v1388, %v1356
          %v1805 = vpack.c.b16 %v1389, %v1357
          %v1806 = vpack.c.b16 %v1390, %v1358
          %v1807 = vpack.c.b16 %v1391, %v1359
          %v1808 = vpack.c.b16 %v1392, %v1360
          %v1809 = vpack.c.b16 %v1393, %v1361
          %v1810 = vpack.c.b16 %v1394, %v1362
          %v1811 = vpack.c.b16 %v1395, %v1363
          %v1812 = vpack.c.b16 %v1396, %v1364
          %v1813 = vpack.c.b16 %v1397, %v1365
          %v1814 = vpack.c.b16 %v1398, %v1366
          %v1815 = vpack.c.b16 %v1399, %v1367
          %v1816 = vpack.c.b16 %v1400, %v1368
          %v1817 = vpack.c.b16 %v1401, %v1369
          %v1818 = vpack.c.b16 %v1402, %v1370
          %v1819 = vpack.c.b16 %v1403, %v1371
          %v1820 = vpack.c.b16 %v1404, %v1372
          %v1821 = vpack.c.b16 %v1405, %v1373
          %v1822 = vpack.c.b16 %v1406, %v1374
          %v1823 = vpack.c.b16 %v1407, %v1375
          %v1824 = vpack.c.b16 %v1408, %v1376
          %v1825 = vpack.c.b16 %v1409, %v1377
          %v1826 = vpack.c.b16 %v1442, %v1410
          %v1827 = vpack.c.b16 %v1443, %v1411
          %v1828 = vpack.c.b16 %v1444, %v1412
          %v1829 = vpack.c.b16 %v1445, %v1413
          %v1830 = vpack.c.b16 %v1446, %v1414
          %v1831 = vpack.c.b16 %v1447, %v1415
          %v1832 = vpack.c.b16 %v1448, %v1416
          %v1833 = vpack.c.b16 %v1449, %v1417
          %v1834 = vpack.c.b16 %v1450, %v1418
          %v1835 = vpack.c.b16 %v1451, %v1419
          %v1836 = vpack.c.b16 %v1452, %v1420
          %v1837 = vpack.c.b16 %v1453, %v1421
          %v1838 = vpack.c.b16 %v1454, %v1422
          %v1839 = vpack.c.b16 %v1455, %v1423
          %v1840 = vpack.c.b16 %v1456, %v1424
          %v1841 = vpack.c.b16 %v1457, %v1425
          %v1842 = vpack.c.b16 %v1458, %v1426
          %v1843 = vpack.c.b16 %v1459, %v1427
          %v1844 = vpack.c.b16 %v1460, %v1428
          %v1845 = vpack.c.b16 %v1461, %v1429
          %v1846 = vpack.c.b16 %v1462, %v1430
          %v1847 = vpack.c.b16 %v1463, %v1431
          %v1848 = vpack.c.b16 %v1464, %v1432
          %v1849 = vpack.c.b16 %v1465, %v1433
          %v1850 = vpack.c.b16 %v1466, %v1434
          %v1851 = vpack.c.b16 %v1467, %v1435
          %v1852 = vpack.c.b16 %v1468, %v1436
          %v1853 = vpack.c.b16 %v1469, %v1437
          %v1854 = vpack.c.b16 %v1470, %v1438
          %v1855 = vpack.c.b16 %v1471, %v1439
          %v1856 = vpack.c.b16 %v1472, %v1440
          %v1857 = vpack.c.b16 %v1473, %v1441
          %v1858 = vpack.c.b16 %v1506, %v1474
          %v1859 = vpack.c.b16 %v1507, %v1475
          %v1860 = vpack.c.b16 %v1508, %v1476
          %v1861 = vpack.c.b16 %v1509, %v1477
          %v1862 = vpack.c.b16 %v1510, %v1478
          %v1863 = vpack.c.b16 %v1511, %v1479
          %v1864 = vpack.c.b16 %v1512, %v1480
          %v1865 = vpack.c.b16 %v1513, %v1481
          %v1866 = vpack.c.b16 %v1514, %v1482
          %v1867 = vpack.c.b16 %v1515, %v1483
          %v1868 = vpack.c.b16 %v1516, %v1484
          %v1869 = vpack.c.b16 %v1517, %v1485
          %v1870 = vpack.c.b16 %v1518, %v1486
          %v1871 = vpack.c.b16 %v1519, %v1487
          %v1872 = vpack.c.b16 %v1520, %v1488
          %v1873 = vpack.c.b16 %v1521, %v1489
          %v1874 = vpack.c.b16 %v1522, %v1490
          %v1875 = vpack.c.b16 %v1523, %v1491
          %v1876 = vpack.c.b16 %v1524, %v1492
          %v1877 = vpack.c.b16 %v1525, %v1493
          %v1878 = vpack.c.b16 %v1526, %v1494
          %v1879 = vpack.c.b16 %v1527, %v1495
          %v1880 = vpack.c.b16 %v1528, %v1496
          %v1881 = vpack.c.b16 %v1529, %v1497
          %v1882 = vpack.c.b16 %v1530, %v1498
          %v1883 = vpack.c.b16 %v1531, %v1499
          %v1884 = vpack.c.b16 %v1532, %v1500
          %v1885 = vpack.c.b16 %v1533, %v1501
          %v1886 = vpack.c.b16 %v1534, %v1502
          %v1887 = vpack.c.b16 %v1535, %v1503
          %v1888 = vpack.c.b16 %v1536, %v1504
          %v1889 = vpack.c.b16 %v1537, %v1505
          %v1890 = vpack.c.b16 %v1570, %v1538
          %v1891 = vpack.c.b16 %v1571, %v1539
          %v1892 = vpack.c.b16 %v1572, %v1540
          %v1893 = vpack.c.b16 %v1573, %v1541
          %v1894 = vpack.c.b16 %v1574, %v1542
          %v1895 = vpack.c.b16 %v1575, %v1543
          %v1896 = vpack.c.b16 %v1576, %v1544
          %v1897 = vpack.c.b16 %v1577, %v1545
          %v1898 = vpack.c.b16 %v1578, %v1546
          %v1899 = vpack.c.b16 %v1579, %v1547
          %v1900 = vpack.c.b16 %v1580, %v1548
          %v1901 = vpack.c.b16 %v1581, %v1549
          %v1902 = vpack.c.b16 %v1582, %v1550
          %v1903 = vpack.c.b16 %v1583, %v1551
          %v1904 = vpack.c.b16 %v1584, %v1552
          %v1905 = vpack.c.b16 %v1585, %v1553
          %v1906 = vpack.c.b16 %v1586, %v1554
          %v1907 = vpack.c.b16 %v1587, %v1555
          %v1908 = vpack.c.b16 %v1588, %v1556
          %v1909 = vpack.c.b16 %v1589, %v1557
          %v1910 = vpack.c.b16 %v1590, %v1558
          %v1911 = vpack.c.b16 %v1591, %v1559
          %v1912 = vpack.c.b16 %v1592, %v1560
          %v1913 = vpack.c.b16 %v1593, %v1561
          %v1914 = vpack.c.b16 %v1594, %v1562
          %v1915 = vpack.c.b16 %v1595, %v1563
          %v1916 = vpack.c.b16 %v1596, %v1564
          %v1917 = vpack.c.b16 %v1597, %v1565
          %v1918 = vpack.c.b16 %v1598, %v1566
          %v1919 = vpack.c.b16 %v1599, %v1567
          %v1920 = vpack.c.b16 %v1600, %v1568
          %v1921 = vpack.c.b16 %v1601, %v1569
          %v1922 = vpack.c.b16 %v1634, %v1602
          %v1923 = vpack.c.b16 %v1635, %v1603
          %v1924 = vpack.c.b16 %v1636, %v1604
          %v1925 = vpack.c.b16 %v1637, %v1605
          %v1926 = vpack.c.b16 %v1638, %v1606
          %v1927 = vpack.c.b16 %v1639, %v1607
          %v1928 = vpack.c.b16 %v1640, %v1608
          %v1929 = vpack.c.b16 %v1641, %v1609
          %v1930 = vpack.c.b16 %v1642, %v1610
          %v1931 = vpack.c.b16 %v1643, %v1611
          %v1932 = vpack.c.b16 %v1644, %v1612
          %v1933 = vpack.c.b16 %v1645, %v1613
          %v1934 = vpack.c.b16 %v1646, %v1614
          %v1935 = vpack.c.b16 %v1647, %v1615
          %v1936 = vpack.c.b16 %v1648, %v1616
          %v1937 = vpack.c.b16 %v1649, %v1617
          %v1938 = vpack.c.b16 %v1650, %v1618
          %v1939 = vpack.c.b16 %v1651, %v1619
          %v1940 = vpack.c.b16 %v1652, %v1620
          %v1941 = vpack.c.b16 %v1653, %v1621
          %v1942 = vpack.c.b16 %v1654, %v1622
          %v1943 = vpack.c.b16 %v1655, %v1623
          %v1944 = vpack.c.b16 %v1656, %v1624
          %v1945 = vpack.c.b16 %v1657, %v1625
          %v1946 = vpack.c.b16 %v1658, %v1626
          %v1947 = vpack.c.b16 %v1659, %v1627
          %v1948 = vpack.c.b16 %v1660, %v1628
          %v1949 = vpack.c.b16 %v1661, %v1629
          %v1950 = vpack.c.b16 %v1662, %v1630
          %v1951 = vpack.c.b16 %v1663, %v1631
          %v1952 = vpack.c.b16 %v1664, %v1632
          %v1953 = vpack.c.b16 %v1665, %v1633
          %v1954 = vpack.c.b16 %v1698, %v1666
          %v1955 = vpack.c.b16 %v1699, %v1667
          %v1956 = vpack.c.b16 %v1700, %v1668
          %v1957 = vpack.c.b16 %v1701, %v1669
          %v1958 = vpack.c.b16 %v1702, %v1670
          %v1959 = vpack.c.b16 %v1703, %v1671
          %v1960 = vpack.c.b16 %v1704, %v1672
          %v1961 = vpack.c.b16 %v1705, %v1673
          %v1962 = vpack.c.b16 %v1706, %v1674
          %v1963 = vpack.c.b16 %v1707, %v1675
          %v1964 = vpack.c.b16 %v1708, %v1676
          %v1965 = vpack.c.b16 %v1709, %v1677
          %v1966 = vpack.c.b16 %v1710, %v1678
          %v1967 = vpack.c.b16 %v1711, %v1679
          %v1968 = vpack.c.b16 %v1712, %v1680
          %v1969 = vpack.c.b16 %v1713, %v1681
          %v1970 = vpack.c.b16 %v1714, %v1682
          %v1971 = vpack.c.b16 %v1715, %v1683
          %v1972 = vpack.c.b16 %v1716, %v1684
          %v1973 = vpack.c.b16 %v1717, %v1685
          %v1974 = vpack.c.b16 %v1718, %v1686
          %v1975 = vpack.c.b16 %v1719, %v1687
          %v1976 = vpack.c.b16 %v1720, %v1688
          %v1977 = vpack.c.b16 %v1721, %v1689
          %v1978 = vpack.c.b16 %v1722, %v1690
          %v1979 = vpack.c.b16 %v1723, %v1691
          %v1980 = vpack.c.b16 %v1724, %v1692
          %v1981 = vpack.c.b16 %v1725, %v1693
          %v1982 = vpack.c.b16 %v1726, %v1694
          %v1983 = vpack.c.b16 %v1727, %v1695
          %v1984 = vpack.c.b16 %v1728, %v1696
          %v1985 = vpack.c.b16 %v1729, %v1697
          %2242 = vmatprep.subr.bf16.mxu0 %v1731
          %2243 = vmatpush1.bf16.msra.mxu0 %v1730
          %2244 = vmatprep.subr.bf16.mxu0 %v1763
          %2245 = vmatpush1.bf16.msra.mxu0 %v1762
          %2246 = vmatprep.subr.bf16.mxu0 %v1795
          %2247 = vmatpush1.bf16.msra.mxu0 %v1794
          %2248 = vmatprep.subr.bf16.mxu0 %v1827
          %2249 = vmatpush1.bf16.msra.mxu0 %v1826
          %2250 = vmatprep.subr.bf16.mxu0 %v1859
          %2251 = vmatpush1.bf16.msra.mxu0 %v1858
          %2252 = vmatprep.subr.bf16.mxu0 %v1891
          %2253 = vmatpush1.bf16.msra.mxu0 %v1890
          %2254 = vmatprep.subr.bf16.mxu0 %v1923
          %2255 = vmatpush1.bf16.msra.mxu0 %v1922
          %2256 = vmatprep.subr.bf16.mxu0 %v1955
          %2257 = vmatpush1.bf16.msra.mxu0 %v1954
          %2258 = vmatprep.subr.bf16.mxu0 0
          %2259 = vmatpush1.bf16.msra.mxu0 0
          %2260 = vmatprep.subr.bf16.mxu0 0
          %2261 = vmatpush1.bf16.msra.mxu0 0
          %2262 = vmatprep.subr.bf16.mxu0 0
          %2263 = vmatpush1.bf16.msra.mxu0 0
          %2264 = vmatprep.subr.bf16.mxu0 0
          %2265 = vmatpush1.bf16.msra.mxu0 0
          %2266 = vmatprep.subr.bf16.mxu0 0
          %2267 = vmatpush1.bf16.msra.mxu0 0
          %2268 = vmatprep.subr.bf16.mxu0 0
          %2269 = vmatpush1.bf16.msra.mxu0 0
          %2270 = vmatprep.subr.bf16.mxu0 0
          %2271 = vmatpush1.bf16.msra.mxu0 0
          %2272 = vmatprep.subr.bf16.mxu0 0
          %2273 = vmatpush1.bf16.msra.mxu0 0
          %2274 = vmatprep.mubr.bf16.mxu0 0
          %2275 = vmatmul.mubr.bf16.gmra.mrb[0].mxu0 %v537
          %v2276 = vpop.f32.mrb[0].mxu0
          %v2277 = vadd.f32 %v805, %v2276
          %v2278 = vpop.f32.mrb[0].mxu0
          %v2279 = vadd.f32 %v809, %v2278
          %v2280 = vpop.f32.mrb[0].mxu0
          %v2281 = vadd.f32 %v805, %v2280
          %v2282 = vpop.f32.mrb[0].mxu0
          %v2283 = vadd.f32 %v809, %v2282
          %2284 = vdwg.mxu0
          %2285 = vmatprep.subr.bf16.mxu0 %v1733
          %2286 = vmatpush1.bf16.msra.mxu0 %v1732
          %2287 = vmatprep.subr.bf16.mxu0 %v1765
          %2288 = vmatpush1.bf16.msra.mxu0 %v1764
          %2289 = vmatprep.subr.bf16.mxu0 %v1797
          %2290 = vmatpush1.bf16.msra.mxu0 %v1796
          %2291 = vmatprep.subr.bf16.mxu0 %v1829
          %2292 = vmatpush1.bf16.msra.mxu0 %v1828
          %2293 = vmatprep.subr.bf16.mxu0 %v1861
          %2294 = vmatpush1.bf16.msra.mxu0 %v1860
          %2295 = vmatprep.subr.bf16.mxu0 %v1893
          %2296 = vmatpush1.bf16.msra.mxu0 %v1892
          %2297 = vmatprep.subr.bf16.mxu0 %v1925
          %2298 = vmatpush1.bf16.msra.mxu0 %v1924
          %2299 = vmatprep.subr.bf16.mxu0 %v1957
          %2300 = vmatpush1.bf16.msra.mxu0 %v1956
          %2301 = vmatprep.subr.bf16.mxu0 0
          %2302 = vmatpush1.bf16.msra.mxu0 0
          %2303 = vmatprep.subr.bf16.mxu0 0
          %2304 = vmatpush1.bf16.msra.mxu0 0
          %2305 = vmatprep.subr.bf16.mxu0 0
          %2306 = vmatpush1.bf16.msra.mxu0 0
          %2307 = vmatprep.subr.bf16.mxu0 0
          %2308 = vmatpush1.bf16.msra.mxu0 0
          %2309 = vmatprep.subr.bf16.mxu0 0
          %2310 = vmatpush1.bf16.msra.mxu0 0
          %2311 = vmatprep.subr.bf16.mxu0 0
          %2312 = vmatpush1.bf16.msra.mxu0 0
          %2313 = vmatprep.subr.bf16.mxu0 0
          %2314 = vmatpush1.bf16.msra.mxu0 0
          %2315 = vmatprep.subr.bf16.mxu0 0
          %2316 = vmatpush1.bf16.msra.mxu0 0
          %2317 = vmatprep.mubr.bf16.mxu0 0
          %2318 = vmatmul.mubr.bf16.gmra.mrb[0].mxu0 %v537
          %v2319 = vpop.f32.mrb[0].mxu0
          %v2320 = vadd.f32 %v813, %v2319
          %v2321 = vpop.f32.mrb[0].mxu0
          %v2322 = vadd.f32 %v817, %v2321
          %v2323 = vpop.f32.mrb[0].mxu0
          %v2324 = vadd.f32 %v813, %v2323
          %v2325 = vpop.f32.mrb[0].mxu0
          %v2326 = vadd.f32 %v817, %v2325
          %2327 = vdwg.mxu0
          %2328 = vmatprep.subr.bf16.mxu0 %v1735
          %2329 = vmatpush1.bf16.msra.mxu0 %v1734
          %2330 = vmatprep.subr.bf16.mxu0 %v1767
          %2331 = vmatpush1.bf16.msra.mxu0 %v1766
          %2332 = vmatprep.subr.bf16.mxu0 %v1799
          %2333 = vmatpush1.bf16.msra.mxu0 %v1798
          %2334 = vmatprep.subr.bf16.mxu0 %v1831
          %2335 = vmatpush1.bf16.msra.mxu0 %v1830
          %2336 = vmatprep.subr.bf16.mxu0 %v1863
          %2337 = vmatpush1.bf16.msra.mxu0 %v1862
          %2338 = vmatprep.subr.bf16.mxu0 %v1895
          %2339 = vmatpush1.bf16.msra.mxu0 %v1894
          %2340 = vmatprep.subr.bf16.mxu0 %v1927
          %2341 = vmatpush1.bf16.msra.mxu0 %v1926
          %2342 = vmatprep.subr.bf16.mxu0 %v1959
          %2343 = vmatpush1.bf16.msra.mxu0 %v1958
          %2344 = vmatprep.subr.bf16.mxu0 0
          %2345 = vmatpush1.bf16.msra.mxu0 0
          %2346 = vmatprep.subr.bf16.mxu0 0
          %2347 = vmatpush1.bf16.msra.mxu0 0
          %2348 = vmatprep.subr.bf16.mxu0 0
          %2349 = vmatpush1.bf16.msra.mxu0 0
          %2350 = vmatprep.subr.bf16.mxu0 0
          %2351 = vmatpush1.bf16.msra.mxu0 0
          %2352 = vmatprep.subr.bf16.mxu0 0
          %2353 = vmatpush1.bf16.msra.mxu0 0
          %2354 = vmatprep.subr.bf16.mxu0 0
          %2355 = vmatpush1.bf16.msra.mxu0 0
          %2356 = vmatprep.subr.bf16.mxu0 0
          %2357 = vmatpush1.bf16.msra.mxu0 0
          %2358 = vmatprep.subr.bf16.mxu0 0
          %2359 = vmatpush1.bf16.msra.mxu0 0
          %2360 = vmatprep.mubr.bf16.mxu0 0
          %2361 = vmatmul.mubr.bf16.gmra.mrb[0].mxu0 %v537
          %v2362 = vpop.f32.mrb[0].mxu0
          %v2363 = vadd.f32 %v821, %v2362
          %v2364 = vpop.f32.mrb[0].mxu0
          %v2365 = vadd.f32 %v825, %v2364
          %v2366 = vpop.f32.mrb[0].mxu0
          %v2367 = vadd.f32 %v821, %v2366
          %v2368 = vpop.f32.mrb[0].mxu0
          %v2369 = vadd.f32 %v825, %v2368
          %2370 = vdwg.mxu0
          %2371 = vmatprep.subr.bf16.mxu0 %v1737
          %2372 = vmatpush1.bf16.msra.mxu0 %v1736
          %2373 = vmatprep.subr.bf16.mxu0 %v1769
          %2374 = vmatpush1.bf16.msra.mxu0 %v1768
          %2375 = vmatprep.subr.bf16.mxu0 %v1801
          %2376 = vmatpush1.bf16.msra.mxu0 %v1800
          %2377 = vmatprep.subr.bf16.mxu0 %v1833
          %2378 = vmatpush1.bf16.msra.mxu0 %v1832
          %2379 = vmatprep.subr.bf16.mxu0 %v1865
          %2380 = vmatpush1.bf16.msra.mxu0 %v1864
          %2381 = vmatprep.subr.bf16.mxu0 %v1897
          %2382 = vmatpush1.bf16.msra.mxu0 %v1896
          %2383 = vmatprep.subr.bf16.mxu0 %v1929
          %2384 = vmatpush1.bf16.msra.mxu0 %v1928
          %2385 = vmatprep.subr.bf16.mxu0 %v1961
          %2386 = vmatpush1.bf16.msra.mxu0 %v1960
          %2387 = vmatprep.subr.bf16.mxu0 0
          %2388 = vmatpush1.bf16.msra.mxu0 0
          %2389 = vmatprep.subr.bf16.mxu0 0
          %2390 = vmatpush1.bf16.msra.mxu0 0
          %2391 = vmatprep.subr.bf16.mxu0 0
          %2392 = vmatpush1.bf16.msra.mxu0 0
          %2393 = vmatprep.subr.bf16.mxu0 0
          %2394 = vmatpush1.bf16.msra.mxu0 0
          %2395 = vmatprep.subr.bf16.mxu0 0
          %2396 = vmatpush1.bf16.msra.mxu0 0
          %2397 = vmatprep.subr.bf16.mxu0 0
          %2398 = vmatpush1.bf16.msra.mxu0 0
          %2399 = vmatprep.subr.bf16.mxu0 0
          %2400 = vmatpush1.bf16.msra.mxu0 0
          %2401 = vmatprep.subr.bf16.mxu0 0
          %2402 = vmatpush1.bf16.msra.mxu0 0
          %2403 = vmatprep.mubr.bf16.mxu0 0
          %2404 = vmatmul.mubr.bf16.gmra.mrb[0].mxu0 %v537
          %v2405 = vpop.f32.mrb[0].mxu0
          %v2406 = vadd.f32 %v829, %v2405
          %v2407 = vpop.f32.mrb[0].mxu0
          %v2408 = vadd.f32 %v833, %v2407
          %v2409 = vpop.f32.mrb[0].mxu0
          %v2410 = vadd.f32 %v829, %v2409
          %v2411 = vpop.f32.mrb[0].mxu0
          %v2412 = vadd.f32 %v833, %v2411
          %2413 = vdwg.mxu0
          %2414 = vmatprep.subr.bf16.mxu0 %v1739
          %2415 = vmatpush1.bf16.msra.mxu0 %v1738
          %2416 = vmatprep.subr.bf16.mxu0 %v1771
          %2417 = vmatpush1.bf16.msra.mxu0 %v1770
          %2418 = vmatprep.subr.bf16.mxu0 %v1803
          %2419 = vmatpush1.bf16.msra.mxu0 %v1802
          %2420 = vmatprep.subr.bf16.mxu0 %v1835
          %2421 = vmatpush1.bf16.msra.mxu0 %v1834
          %2422 = vmatprep.subr.bf16.mxu0 %v1867
          %2423 = vmatpush1.bf16.msra.mxu0 %v1866
          %2424 = vmatprep.subr.bf16.mxu0 %v1899
          %2425 = vmatpush1.bf16.msra.mxu0 %v1898
          %2426 = vmatprep.subr.bf16.mxu0 %v1931
          %2427 = vmatpush1.bf16.msra.mxu0 %v1930
          %2428 = vmatprep.subr.bf16.mxu0 %v1963
          %2429 = vmatpush1.bf16.msra.mxu0 %v1962
          %2430 = vmatprep.subr.bf16.mxu0 0
          %2431 = vmatpush1.bf16.msra.mxu0 0
          %2432 = vmatprep.subr.bf16.mxu0 0
          %2433 = vmatpush1.bf16.msra.mxu0 0
          %2434 = vmatprep.subr.bf16.mxu0 0
          %2435 = vmatpush1.bf16.msra.mxu0 0
          %2436 = vmatprep.subr.bf16.mxu0 0
          %2437 = vmatpush1.bf16.msra.mxu0 0
          %2438 = vmatprep.subr.bf16.mxu0 0
          %2439 = vmatpush1.bf16.msra.mxu0 0
          %2440 = vmatprep.subr.bf16.mxu0 0
          %2441 = vmatpush1.bf16.msra.mxu0 0
          %2442 = vmatprep.subr.bf16.mxu0 0
          %2443 = vmatpush1.bf16.msra.mxu0 0
          %2444 = vmatprep.subr.bf16.mxu0 0
          %2445 = vmatpush1.bf16.msra.mxu0 0
          %2446 = vmatprep.mubr.bf16.mxu0 0
          %2447 = vmatmul.mubr.bf16.gmra.mrb[0].mxu0 %v537
          %v2448 = vpop.f32.mrb[0].mxu0
          %v2449 = vadd.f32 %v837, %v2448
          %v2450 = vpop.f32.mrb[0].mxu0
          %v2451 = vadd.f32 %v841, %v2450
          %v2452 = vpop.f32.mrb[0].mxu0
          %v2453 = vadd.f32 %v837, %v2452
          %v2454 = vpop.f32.mrb[0].mxu0
          %v2455 = vadd.f32 %v841, %v2454
          %2456 = vdwg.mxu0
          %2457 = vmatprep.subr.bf16.mxu0 %v1741
          %2458 = vmatpush1.bf16.msra.mxu0 %v1740
          %2459 = vmatprep.subr.bf16.mxu0 %v1773
          %2460 = vmatpush1.bf16.msra.mxu0 %v1772
          %2461 = vmatprep.subr.bf16.mxu0 %v1805
          %2462 = vmatpush1.bf16.msra.mxu0 %v1804
          %2463 = vmatprep.subr.bf16.mxu0 %v1837
          %2464 = vmatpush1.bf16.msra.mxu0 %v1836
          %2465 = vmatprep.subr.bf16.mxu0 %v1869
          %2466 = vmatpush1.bf16.msra.mxu0 %v1868
          %2467 = vmatprep.subr.bf16.mxu0 %v1901
          %2468 = vmatpush1.bf16.msra.mxu0 %v1900
          %2469 = vmatprep.subr.bf16.mxu0 %v1933
          %2470 = vmatpush1.bf16.msra.mxu0 %v1932
          %2471 = vmatprep.subr.bf16.mxu0 %v1965
          %2472 = vmatpush1.bf16.msra.mxu0 %v1964
          %2473 = vmatprep.subr.bf16.mxu0 0
          %2474 = vmatpush1.bf16.msra.mxu0 0
          %2475 = vmatprep.subr.bf16.mxu0 0
          %2476 = vmatpush1.bf16.msra.mxu0 0
          %2477 = vmatprep.subr.bf16.mxu0 0
          %2478 = vmatpush1.bf16.msra.mxu0 0
          %2479 = vmatprep.subr.bf16.mxu0 0
          %2480 = vmatpush1.bf16.msra.mxu0 0
          %2481 = vmatprep.subr.bf16.mxu0 0
          %2482 = vmatpush1.bf16.msra.mxu0 0
          %2483 = vmatprep.subr.bf16.mxu0 0
          %2484 = vmatpush1.bf16.msra.mxu0 0
          %2485 = vmatprep.subr.bf16.mxu0 0
          %2486 = vmatpush1.bf16.msra.mxu0 0
          %2487 = vmatprep.subr.bf16.mxu0 0
          %2488 = vmatpush1.bf16.msra.mxu0 0
          %2489 = vmatprep.mubr.bf16.mxu0 0
          %2490 = vmatmul.mubr.bf16.gmra.mrb[0].mxu0 %v537
          %v2491 = vpop.f32.mrb[0].mxu0
          %v2492 = vadd.f32 %v845, %v2491
          %v2493 = vpop.f32.mrb[0].mxu0
          %v2494 = vadd.f32 %v849, %v2493
          %v2495 = vpop.f32.mrb[0].mxu0
          %v2496 = vadd.f32 %v845, %v2495
          %v2497 = vpop.f32.mrb[0].mxu0
          %v2498 = vadd.f32 %v849, %v2497
          %2499 = vdwg.mxu0
          %2500 = vmatprep.subr.bf16.mxu0 %v1743
          %2501 = vmatpush1.bf16.msra.mxu0 %v1742
          %2502 = vmatprep.subr.bf16.mxu0 %v1775
          %2503 = vmatpush1.bf16.msra.mxu0 %v1774
          %2504 = vmatprep.subr.bf16.mxu0 %v1807
          %2505 = vmatpush1.bf16.msra.mxu0 %v1806
          %2506 = vmatprep.subr.bf16.mxu0 %v1839
          %2507 = vmatpush1.bf16.msra.mxu0 %v1838
          %2508 = vmatprep.subr.bf16.mxu0 %v1871
          %2509 = vmatpush1.bf16.msra.mxu0 %v1870
          %2510 = vmatprep.subr.bf16.mxu0 %v1903
          %2511 = vmatpush1.bf16.msra.mxu0 %v1902
          %2512 = vmatprep.subr.bf16.mxu0 %v1935
          %2513 = vmatpush1.bf16.msra.mxu0 %v1934
          %2514 = vmatprep.subr.bf16.mxu0 %v1967
          %2515 = vmatpush1.bf16.msra.mxu0 %v1966
          %2516 = vmatprep.subr.bf16.mxu0 0
          %2517 = vmatpush1.bf16.msra.mxu0 0
          %2518 = vmatprep.subr.bf16.mxu0 0
          %2519 = vmatpush1.bf16.msra.mxu0 0
          %2520 = vmatprep.subr.bf16.mxu0 0
          %2521 = vmatpush1.bf16.msra.mxu0 0
          %2522 = vmatprep.subr.bf16.mxu0 0
          %2523 = vmatpush1.bf16.msra.mxu0 0
          %2524 = vmatprep.subr.bf16.mxu0 0
          %2525 = vmatpush1.bf16.msra.mxu0 0
          %2526 = vmatprep.subr.bf16.mxu0 0
          %2527 = vmatpush1.bf16.msra.mxu0 0
          %2528 = vmatprep.subr.bf16.mxu0 0
          %2529 = vmatpush1.bf16.msra.mxu0 0
          %2530 = vmatprep.subr.bf16.mxu0 0
          %2531 = vmatpush1.bf16.msra.mxu0 0
          %2532 = vmatprep.mubr.bf16.mxu0 0
          %2533 = vmatmul.mubr.bf16.gmra.mrb[0].mxu0 %v537
          %v2534 = vpop.f32.mrb[0].mxu0
          %v2535 = vadd.f32 %v853, %v2534
          %v2536 = vpop.f32.mrb[0].mxu0
          %v2537 = vadd.f32 %v857, %v2536
          %v2538 = vpop.f32.mrb[0].mxu0
          %v2539 = vadd.f32 %v853, %v2538
          %v2540 = vpop.f32.mrb[0].mxu0
          %v2541 = vadd.f32 %v857, %v2540
          %2542 = vdwg.mxu0
          %2543 = vmatprep.subr.bf16.mxu0 %v1745
          %2544 = vmatpush1.bf16.msra.mxu0 %v1744
          %2545 = vmatprep.subr.bf16.mxu0 %v1777
          %2546 = vmatpush1.bf16.msra.mxu0 %v1776
          %2547 = vmatprep.subr.bf16.mxu0 %v1809
          %2548 = vmatpush1.bf16.msra.mxu0 %v1808
          %2549 = vmatprep.subr.bf16.mxu0 %v1841
          %2550 = vmatpush1.bf16.msra.mxu0 %v1840
          %2551 = vmatprep.subr.bf16.mxu0 %v1873
          %2552 = vmatpush1.bf16.msra.mxu0 %v1872
          %2553 = vmatprep.subr.bf16.mxu0 %v1905
          %2554 = vmatpush1.bf16.msra.mxu0 %v1904
          %2555 = vmatprep.subr.bf16.mxu0 %v1937
          %2556 = vmatpush1.bf16.msra.mxu0 %v1936
          %2557 = vmatprep.subr.bf16.mxu0 %v1969
          %2558 = vmatpush1.bf16.msra.mxu0 %v1968
          %2559 = vmatprep.subr.bf16.mxu0 0
          %2560 = vmatpush1.bf16.msra.mxu0 0
          %2561 = vmatprep.subr.bf16.mxu0 0
          %2562 = vmatpush1.bf16.msra.mxu0 0
          %2563 = vmatprep.subr.bf16.mxu0 0
          %2564 = vmatpush1.bf16.msra.mxu0 0
          %2565 = vmatprep.subr.bf16.mxu0 0
          %2566 = vmatpush1.bf16.msra.mxu0 0
          %2567 = vmatprep.subr.bf16.mxu0 0
          %2568 = vmatpush1.bf16.msra.mxu0 0
          %2569 = vmatprep.subr.bf16.mxu0 0
          %2570 = vmatpush1.bf16.msra.mxu0 0
          %2571 = vmatprep.subr.bf16.mxu0 0
          %2572 = vmatpush1.bf16.msra.mxu0 0
          %2573 = vmatprep.subr.bf16.mxu0 0
          %2574 = vmatpush1.bf16.msra.mxu0 0
          %2575 = vmatprep.mubr.bf16.mxu0 0
          %2576 = vmatmul.mubr.bf16.gmra.mrb[0].mxu0 %v537
          %v2577 = vpop.f32.mrb[0].mxu0
          %v2578 = vadd.f32 %v861, %v2577
          %v2579 = vpop.f32.mrb[0].mxu0
          %v2580 = vadd.f32 %v865, %v2579
          %v2581 = vpop.f32.mrb[0].mxu0
          %v2582 = vadd.f32 %v861, %v2581
          %v2583 = vpop.f32.mrb[0].mxu0
          %v2584 = vadd.f32 %v865, %v2583
          %2585 = vdwg.mxu0
          %2586 = vmatprep.subr.bf16.mxu0 %v1747
          %2587 = vmatpush1.bf16.msra.mxu0 %v1746
          %2588 = vmatprep.subr.bf16.mxu0 %v1779
          %2589 = vmatpush1.bf16.msra.mxu0 %v1778
          %2590 = vmatprep.subr.bf16.mxu0 %v1811
          %2591 = vmatpush1.bf16.msra.mxu0 %v1810
          %2592 = vmatprep.subr.bf16.mxu0 %v1843
          %2593 = vmatpush1.bf16.msra.mxu0 %v1842
          %2594 = vmatprep.subr.bf16.mxu0 %v1875
          %2595 = vmatpush1.bf16.msra.mxu0 %v1874
          %2596 = vmatprep.subr.bf16.mxu0 %v1907
          %2597 = vmatpush1.bf16.msra.mxu0 %v1906
          %2598 = vmatprep.subr.bf16.mxu0 %v1939
          %2599 = vmatpush1.bf16.msra.mxu0 %v1938
          %2600 = vmatprep.subr.bf16.mxu0 %v1971
          %2601 = vmatpush1.bf16.msra.mxu0 %v1970
          %2602 = vmatprep.subr.bf16.mxu0 0
          %2603 = vmatpush1.bf16.msra.mxu0 0
          %2604 = vmatprep.subr.bf16.mxu0 0
          %2605 = vmatpush1.bf16.msra.mxu0 0
          %2606 = vmatprep.subr.bf16.mxu0 0
          %2607 = vmatpush1.bf16.msra.mxu0 0
          %2608 = vmatprep.subr.bf16.mxu0 0
          %2609 = vmatpush1.bf16.msra.mxu0 0
          %2610 = vmatprep.subr.bf16.mxu0 0
          %2611 = vmatpush1.bf16.msra.mxu0 0
          %2612 = vmatprep.subr.bf16.mxu0 0
          %2613 = vmatpush1.bf16.msra.mxu0 0
          %2614 = vmatprep.subr.bf16.mxu0 0
          %2615 = vmatpush1.bf16.msra.mxu0 0
          %2616 = vmatprep.subr.bf16.mxu0 0
          %2617 = vmatpush1.bf16.msra.mxu0 0
          %2618 = vmatprep.mubr.bf16.mxu0 0
          %2619 = vmatmul.mubr.bf16.gmra.mrb[0].mxu0 %v537
          %v2620 = vpop.f32.mrb[0].mxu0
          %v2621 = vadd.f32 %v869, %v2620
          %v2622 = vpop.f32.mrb[0].mxu0
          %v2623 = vadd.f32 %v873, %v2622
          %v2624 = vpop.f32.mrb[0].mxu0
          %v2625 = vadd.f32 %v869, %v2624
          %v2626 = vpop.f32.mrb[0].mxu0
          %v2627 = vadd.f32 %v873, %v2626
          %2628 = vdwg.mxu0
          %2629 = vmatprep.subr.bf16.mxu0 %v1749
          %2630 = vmatpush1.bf16.msra.mxu0 %v1748
          %2631 = vmatprep.subr.bf16.mxu0 %v1781
          %2632 = vmatpush1.bf16.msra.mxu0 %v1780
          %2633 = vmatprep.subr.bf16.mxu0 %v1813
          %2634 = vmatpush1.bf16.msra.mxu0 %v1812
          %2635 = vmatprep.subr.bf16.mxu0 %v1845
          %2636 = vmatpush1.bf16.msra.mxu0 %v1844
          %2637 = vmatprep.subr.bf16.mxu0 %v1877
          %2638 = vmatpush1.bf16.msra.mxu0 %v1876
          %2639 = vmatprep.subr.bf16.mxu0 %v1909
          %2640 = vmatpush1.bf16.msra.mxu0 %v1908
          %2641 = vmatprep.subr.bf16.mxu0 %v1941
          %2642 = vmatpush1.bf16.msra.mxu0 %v1940
          %2643 = vmatprep.subr.bf16.mxu0 %v1973
          %2644 = vmatpush1.bf16.msra.mxu0 %v1972
          %2645 = vmatprep.subr.bf16.mxu0 0
          %2646 = vmatpush1.bf16.msra.mxu0 0
          %2647 = vmatprep.subr.bf16.mxu0 0
          %2648 = vmatpush1.bf16.msra.mxu0 0
          %2649 = vmatprep.subr.bf16.mxu0 0
          %2650 = vmatpush1.bf16.msra.mxu0 0
          %2651 = vmatprep.subr.bf16.mxu0 0
          %2652 = vmatpush1.bf16.msra.mxu0 0
          %2653 = vmatprep.subr.bf16.mxu0 0
          %2654 = vmatpush1.bf16.msra.mxu0 0
          %2655 = vmatprep.subr.bf16.mxu0 0
          %2656 = vmatpush1.bf16.msra.mxu0 0
          %2657 = vmatprep.subr.bf16.mxu0 0
          %2658 = vmatpush1.bf16.msra.mxu0 0
          %2659 = vmatprep.subr.bf16.mxu0 0
          %2660 = vmatpush1.bf16.msra.mxu0 0
          %2661 = vmatprep.mubr.bf16.mxu0 0
          %2662 = vmatmul.mubr.bf16.gmra.mrb[0].mxu0 %v537
          %v2663 = vpop.f32.mrb[0].mxu0
          %v2664 = vadd.f32 %v877, %v2663
          %v2665 = vpop.f32.mrb[0].mxu0
          %v2666 = vadd.f32 %v881, %v2665
          %v2667 = vpop.f32.mrb[0].mxu0
          %v2668 = vadd.f32 %v877, %v2667
          %v2669 = vpop.f32.mrb[0].mxu0
          %v2670 = vadd.f32 %v881, %v2669
          %2671 = vdwg.mxu0
          %2672 = vmatprep.subr.bf16.mxu0 %v1751
          %2673 = vmatpush1.bf16.msra.mxu0 %v1750
          %2674 = vmatprep.subr.bf16.mxu0 %v1783
          %2675 = vmatpush1.bf16.msra.mxu0 %v1782
          %2676 = vmatprep.subr.bf16.mxu0 %v1815
          %2677 = vmatpush1.bf16.msra.mxu0 %v1814
          %2678 = vmatprep.subr.bf16.mxu0 %v1847
          %2679 = vmatpush1.bf16.msra.mxu0 %v1846
          %2680 = vmatprep.subr.bf16.mxu0 %v1879
          %2681 = vmatpush1.bf16.msra.mxu0 %v1878
          %2682 = vmatprep.subr.bf16.mxu0 %v1911
          %2683 = vmatpush1.bf16.msra.mxu0 %v1910
          %2684 = vmatprep.subr.bf16.mxu0 %v1943
          %2685 = vmatpush1.bf16.msra.mxu0 %v1942
          %2686 = vmatprep.subr.bf16.mxu0 %v1975
          %2687 = vmatpush1.bf16.msra.mxu0 %v1974
          %2688 = vmatprep.subr.bf16.mxu0 0
          %2689 = vmatpush1.bf16.msra.mxu0 0
          %2690 = vmatprep.subr.bf16.mxu0 0
          %2691 = vmatpush1.bf16.msra.mxu0 0
          %2692 = vmatprep.subr.bf16.mxu0 0
          %2693 = vmatpush1.bf16.msra.mxu0 0
          %2694 = vmatprep.subr.bf16.mxu0 0
          %2695 = vmatpush1.bf16.msra.mxu0 0
          %2696 = vmatprep.subr.bf16.mxu0 0
          %2697 = vmatpush1.bf16.msra.mxu0 0
          %2698 = vmatprep.subr.bf16.mxu0 0
          %2699 = vmatpush1.bf16.msra.mxu0 0
          %2700 = vmatprep.subr.bf16.mxu0 0
          %2701 = vmatpush1.bf16.msra.mxu0 0
          %2702 = vmatprep.subr.bf16.mxu0 0
          %2703 = vmatpush1.bf16.msra.mxu0 0
          %2704 = vmatprep.mubr.bf16.mxu0 0
          %2705 = vmatmul.mubr.bf16.gmra.mrb[0].mxu0 %v537
          %v2706 = vpop.f32.mrb[0].mxu0
          %v2707 = vadd.f32 %v885, %v2706
          %v2708 = vpop.f32.mrb[0].mxu0
          %v2709 = vadd.f32 %v889, %v2708
          %v2710 = vpop.f32.mrb[0].mxu0
          %v2711 = vadd.f32 %v885, %v2710
          %v2712 = vpop.f32.mrb[0].mxu0
          %v2713 = vadd.f32 %v889, %v2712
          %2714 = vdwg.mxu0
          %2715 = vmatprep.subr.bf16.mxu0 %v1753
          %2716 = vmatpush1.bf16.msra.mxu0 %v1752
          %2717 = vmatprep.subr.bf16.mxu0 %v1785
          %2718 = vmatpush1.bf16.msra.mxu0 %v1784
          %2719 = vmatprep.subr.bf16.mxu0 %v1817
          %2720 = vmatpush1.bf16.msra.mxu0 %v1816
          %2721 = vmatprep.subr.bf16.mxu0 %v1849
          %2722 = vmatpush1.bf16.msra.mxu0 %v1848
          %2723 = vmatprep.subr.bf16.mxu0 %v1881
          %2724 = vmatpush1.bf16.msra.mxu0 %v1880
          %2725 = vmatprep.subr.bf16.mxu0 %v1913
          %2726 = vmatpush1.bf16.msra.mxu0 %v1912
          %2727 = vmatprep.subr.bf16.mxu0 %v1945
          %2728 = vmatpush1.bf16.msra.mxu0 %v1944
          %2729 = vmatprep.subr.bf16.mxu0 %v1977
          %2730 = vmatpush1.bf16.msra.mxu0 %v1976
          %2731 = vmatprep.subr.bf16.mxu0 0
          %2732 = vmatpush1.bf16.msra.mxu0 0
          %2733 = vmatprep.subr.bf16.mxu0 0
          %2734 = vmatpush1.bf16.msra.mxu0 0
          %2735 = vmatprep.subr.bf16.mxu0 0
          %2736 = vmatpush1.bf16.msra.mxu0 0
          %2737 = vmatprep.subr.bf16.mxu0 0
          %2738 = vmatpush1.bf16.msra.mxu0 0
          %2739 = vmatprep.subr.bf16.mxu0 0
          %2740 = vmatpush1.bf16.msra.mxu0 0
          %2741 = vmatprep.subr.bf16.mxu0 0
          %2742 = vmatpush1.bf16.msra.mxu0 0
          %2743 = vmatprep.subr.bf16.mxu0 0
          %2744 = vmatpush1.bf16.msra.mxu0 0
          %2745 = vmatprep.subr.bf16.mxu0 0
          %2746 = vmatpush1.bf16.msra.mxu0 0
          %2747 = vmatprep.mubr.bf16.mxu0 0
          %2748 = vmatmul.mubr.bf16.gmra.mrb[0].mxu0 %v537
          %v2749 = vpop.f32.mrb[0].mxu0
          %v2750 = vadd.f32 %v893, %v2749
          %v2751 = vpop.f32.mrb[0].mxu0
          %v2752 = vadd.f32 %v897, %v2751
          %v2753 = vpop.f32.mrb[0].mxu0
          %v2754 = vadd.f32 %v893, %v2753
          %v2755 = vpop.f32.mrb[0].mxu0
          %v2756 = vadd.f32 %v897, %v2755
          %2757 = vdwg.mxu0
          %2758 = vmatprep.subr.bf16.mxu0 %v1755
          %2759 = vmatpush1.bf16.msra.mxu0 %v1754
          %2760 = vmatprep.subr.bf16.mxu0 %v1787
          %2761 = vmatpush1.bf16.msra.mxu0 %v1786
          %2762 = vmatprep.subr.bf16.mxu0 %v1819
          %2763 = vmatpush1.bf16.msra.mxu0 %v1818
          %2764 = vmatprep.subr.bf16.mxu0 %v1851
          %2765 = vmatpush1.bf16.msra.mxu0 %v1850
          %2766 = vmatprep.subr.bf16.mxu0 %v1883
          %2767 = vmatpush1.bf16.msra.mxu0 %v1882
          %2768 = vmatprep.subr.bf16.mxu0 %v1915
          %2769 = vmatpush1.bf16.msra.mxu0 %v1914
          %2770 = vmatprep.subr.bf16.mxu0 %v1947
          %2771 = vmatpush1.bf16.msra.mxu0 %v1946
          %2772 = vmatprep.subr.bf16.mxu0 %v1979
          %2773 = vmatpush1.bf16.msra.mxu0 %v1978
          %2774 = vmatprep.subr.bf16.mxu0 0
          %2775 = vmatpush1.bf16.msra.mxu0 0
          %2776 = vmatprep.subr.bf16.mxu0 0
          %2777 = vmatpush1.bf16.msra.mxu0 0
          %2778 = vmatprep.subr.bf16.mxu0 0
          %2779 = vmatpush1.bf16.msra.mxu0 0
          %2780 = vmatprep.subr.bf16.mxu0 0
          %2781 = vmatpush1.bf16.msra.mxu0 0
          %2782 = vmatprep.subr.bf16.mxu0 0
          %2783 = vmatpush1.bf16.msra.mxu0 0
          %2784 = vmatprep.subr.bf16.mxu0 0
          %2785 = vmatpush1.bf16.msra.mxu0 0
          %2786 = vmatprep.subr.bf16.mxu0 0
          %2787 = vmatpush1.bf16.msra.mxu0 0
          %2788 = vmatprep.subr.bf16.mxu0 0
          %2789 = vmatpush1.bf16.msra.mxu0 0
          %2790 = vmatprep.mubr.bf16.mxu0 0
          %2791 = vmatmul.mubr.bf16.gmra.mrb[0].mxu0 %v537
          %v2792 = vpop.f32.mrb[0].mxu0
          %v2793 = vadd.f32 %v901, %v2792
          %v2794 = vpop.f32.mrb[0].mxu0
          %v2795 = vadd.f32 %v905, %v2794
          %v2796 = vpop.f32.mrb[0].mxu0
          %v2797 = vadd.f32 %v901, %v2796
          %v2798 = vpop.f32.mrb[0].mxu0
          %v2799 = vadd.f32 %v905, %v2798
          %2800 = vdwg.mxu0
          %2801 = vmatprep.subr.bf16.mxu0 %v1757
          %2802 = vmatpush1.bf16.msra.mxu0 %v1756
          %2803 = vmatprep.subr.bf16.mxu0 %v1789
          %2804 = vmatpush1.bf16.msra.mxu0 %v1788
          %2805 = vmatprep.subr.bf16.mxu0 %v1821
          %2806 = vmatpush1.bf16.msra.mxu0 %v1820
          %2807 = vmatprep.subr.bf16.mxu0 %v1853
          %2808 = vmatpush1.bf16.msra.mxu0 %v1852
          %2809 = vmatprep.subr.bf16.mxu0 %v1885
          %2810 = vmatpush1.bf16.msra.mxu0 %v1884
          %2811 = vmatprep.subr.bf16.mxu0 %v1917
          %2812 = vmatpush1.bf16.msra.mxu0 %v1916
          %2813 = vmatprep.subr.bf16.mxu0 %v1949
          %2814 = vmatpush1.bf16.msra.mxu0 %v1948
          %2815 = vmatprep.subr.bf16.mxu0 %v1981
          %2816 = vmatpush1.bf16.msra.mxu0 %v1980
          %2817 = vmatprep.subr.bf16.mxu0 0
          %2818 = vmatpush1.bf16.msra.mxu0 0
          %2819 = vmatprep.subr.bf16.mxu0 0
          %2820 = vmatpush1.bf16.msra.mxu0 0
          %2821 = vmatprep.subr.bf16.mxu0 0
          %2822 = vmatpush1.bf16.msra.mxu0 0
          %2823 = vmatprep.subr.bf16.mxu0 0
          %2824 = vmatpush1.bf16.msra.mxu0 0
          %2825 = vmatprep.subr.bf16.mxu0 0
          %2826 = vmatpush1.bf16.msra.mxu0 0
          %2827 = vmatprep.subr.bf16.mxu0 0
          %2828 = vmatpush1.bf16.msra.mxu0 0
          %2829 = vmatprep.subr.bf16.mxu0 0
          %2830 = vmatpush1.bf16.msra.mxu0 0
          %2831 = vmatprep.subr.bf16.mxu0 0
          %2832 = vmatpush1.bf16.msra.mxu0 0
          %2833 = vmatprep.mubr.bf16.mxu0 0
          %2834 = vmatmul.mubr.bf16.gmra.mrb[0].mxu0 %v537
          %v2835 = vpop.f32.mrb[0].mxu0
          %v2836 = vadd.f32 %v909, %v2835
          %v2837 = vpop.f32.mrb[0].mxu0
          %v2838 = vadd.f32 %v913, %v2837
          %v2839 = vpop.f32.mrb[0].mxu0
          %v2840 = vadd.f32 %v909, %v2839
          %v2841 = vpop.f32.mrb[0].mxu0
          %v2842 = vadd.f32 %v913, %v2841
          %2843 = vdwg.mxu0
          %2844 = vmatprep.subr.bf16.mxu0 %v1759
          %2845 = vmatpush1.bf16.msra.mxu0 %v1758
          %2846 = vmatprep.subr.bf16.mxu0 %v1791
          %2847 = vmatpush1.bf16.msra.mxu0 %v1790
          %2848 = vmatprep.subr.bf16.mxu0 %v1823
          %2849 = vmatpush1.bf16.msra.mxu0 %v1822
          %2850 = vmatprep.subr.bf16.mxu0 %v1855
          %2851 = vmatpush1.bf16.msra.mxu0 %v1854
          %2852 = vmatprep.subr.bf16.mxu0 %v1887
          %2853 = vmatpush1.bf16.msra.mxu0 %v1886
          %2854 = vmatprep.subr.bf16.mxu0 %v1919
          %2855 = vmatpush1.bf16.msra.mxu0 %v1918
          %2856 = vmatprep.subr.bf16.mxu0 %v1951
          %2857 = vmatpush1.bf16.msra.mxu0 %v1950
          %2858 = vmatprep.subr.bf16.mxu0 %v1983
          %2859 = vmatpush1.bf16.msra.mxu0 %v1982
          %2860 = vmatprep.subr.bf16.mxu0 0
          %2861 = vmatpush1.bf16.msra.mxu0 0
          %2862 = vmatprep.subr.bf16.mxu0 0
          %2863 = vmatpush1.bf16.msra.mxu0 0
          %2864 = vmatprep.subr.bf16.mxu0 0
          %2865 = vmatpush1.bf16.msra.mxu0 0
          %2866 = vmatprep.subr.bf16.mxu0 0
          %2867 = vmatpush1.bf16.msra.mxu0 0
          %2868 = vmatprep.subr.bf16.mxu0 0
          %2869 = vmatpush1.bf16.msra.mxu0 0
          %2870 = vmatprep.subr.bf16.mxu0 0
          %2871 = vmatpush1.bf16.msra.mxu0 0
          %2872 = vmatprep.subr.bf16.mxu0 0
          %2873 = vmatpush1.bf16.msra.mxu0 0
          %2874 = vmatprep.subr.bf16.mxu0 0
          %2875 = vmatpush1.bf16.msra.mxu0 0
          %2876 = vmatprep.mubr.bf16.mxu0 0
          %2877 = vmatmul.mubr.bf16.gmra.mrb[0].mxu0 %v537
          %v2878 = vpop.f32.mrb[0].mxu0
          %v2879 = vadd.f32 %v917, %v2878
          %v2880 = vpop.f32.mrb[0].mxu0
          %v2881 = vadd.f32 %v921, %v2880
          %v2882 = vpop.f32.mrb[0].mxu0
          %v2883 = vadd.f32 %v917, %v2882
          %v2884 = vpop.f32.mrb[0].mxu0
          %v2885 = vadd.f32 %v921, %v2884
          %2886 = vdwg.mxu0
          %2887 = vmatprep.subr.bf16.mxu0 %v1761
          %2888 = vmatpush1.bf16.msra.mxu0 %v1760
          %2889 = vmatprep.subr.bf16.mxu0 %v1793
          %2890 = vmatpush1.bf16.msra.mxu0 %v1792
          %2891 = vmatprep.subr.bf16.mxu0 %v1825
          %2892 = vmatpush1.bf16.msra.mxu0 %v1824
          %2893 = vmatprep.subr.bf16.mxu0 %v1857
          %2894 = vmatpush1.bf16.msra.mxu0 %v1856
          %2895 = vmatprep.subr.bf16.mxu0 %v1889
          %2896 = vmatpush1.bf16.msra.mxu0 %v1888
          %2897 = vmatprep.subr.bf16.mxu0 %v1921
          %2898 = vmatpush1.bf16.msra.mxu0 %v1920
          %2899 = vmatprep.subr.bf16.mxu0 %v1953
          %2900 = vmatpush1.bf16.msra.mxu0 %v1952
          %2901 = vmatprep.subr.bf16.mxu0 %v1985
          %2902 = vmatpush1.bf16.msra.mxu0 %v1984
          %2903 = vmatprep.subr.bf16.mxu0 0
          %2904 = vmatpush1.bf16.msra.mxu0 0
          %2905 = vmatprep.subr.bf16.mxu0 0
          %2906 = vmatpush1.bf16.msra.mxu0 0
          %2907 = vmatprep.subr.bf16.mxu0 0
          %2908 = vmatpush1.bf16.msra.mxu0 0
          %2909 = vmatprep.subr.bf16.mxu0 0
          %2910 = vmatpush1.bf16.msra.mxu0 0
          %2911 = vmatprep.subr.bf16.mxu0 0
          %2912 = vmatpush1.bf16.msra.mxu0 0
          %2913 = vmatprep.subr.bf16.mxu0 0
          %2914 = vmatpush1.bf16.msra.mxu0 0
          %2915 = vmatprep.subr.bf16.mxu0 0
          %2916 = vmatpush1.bf16.msra.mxu0 0
          %2917 = vmatprep.subr.bf16.mxu0 0
          %2918 = vmatpush1.bf16.msra.mxu0 0
          %2919 = vmatprep.mubr.bf16.mxu0 0
          %2920 = vmatmul.mubr.bf16.gmra.mrb[0].mxu0 %v537
          %v2921 = vpop.f32.mrb[0].mxu0
          %v2922 = vadd.f32 %v925, %v2921
          %v2923 = vpop.f32.mrb[0].mxu0
          %v2924 = vadd.f32 %v929, %v2923
          %v2925 = vpop.f32.mrb[0].mxu0
          %v2926 = vadd.f32 %v925, %v2925
          %v2927 = vpop.f32.mrb[0].mxu0
          %v2928 = vadd.f32 %v929, %v2927
          %2929 = vdwg.mxu0
          %v2930 = vmax.f32 %v2277, 0.0
          %v2931 = vmax.f32 %v2279, 0.0
          %v2932 = vmax.f32 %v2320, 0.0
          %v2933 = vmax.f32 %v2322, 0.0
          %v2934 = vmax.f32 %v2363, 0.0
          %v2935 = vmax.f32 %v2365, 0.0
          %v2936 = vmax.f32 %v2406, 0.0
          %v2937 = vmax.f32 %v2408, 0.0
          %v2938 = vmax.f32 %v2449, 0.0
          %v2939 = vmax.f32 %v2451, 0.0
          %v2940 = vmax.f32 %v2492, 0.0
          %v2941 = vmax.f32 %v2494, 0.0
          %v2942 = vmax.f32 %v2535, 0.0
          %v2943 = vmax.f32 %v2537, 0.0
          %v2944 = vmax.f32 %v2578, 0.0
          %v2945 = vmax.f32 %v2580, 0.0
          %v2946 = vmax.f32 %v2621, 0.0
          %v2947 = vmax.f32 %v2623, 0.0
          %v2948 = vmax.f32 %v2664, 0.0
          %v2949 = vmax.f32 %v2666, 0.0
          %v2950 = vmax.f32 %v2707, 0.0
          %v2951 = vmax.f32 %v2709, 0.0
          %v2952 = vmax.f32 %v2750, 0.0
          %v2953 = vmax.f32 %v2752, 0.0
          %v2954 = vmax.f32 %v2793, 0.0
          %v2955 = vmax.f32 %v2795, 0.0
          %v2956 = vmax.f32 %v2836, 0.0
          %v2957 = vmax.f32 %v2838, 0.0
          %v2958 = vmax.f32 %v2879, 0.0
          %v2959 = vmax.f32 %v2881, 0.0
          %v2960 = vmax.f32 %v2922, 0.0
          %v2961 = vmax.f32 %v2924, 0.0
          %v2962 = vmax.f32 %v2281, 0.0
          %v2963 = vmax.f32 %v2283, 0.0
          %v2964 = vmax.f32 %v2324, 0.0
          %v2965 = vmax.f32 %v2326, 0.0
          %v2966 = vmax.f32 %v2367, 0.0
          %v2967 = vmax.f32 %v2369, 0.0
          %v2968 = vmax.f32 %v2410, 0.0
          %v2969 = vmax.f32 %v2412, 0.0
          %v2970 = vmax.f32 %v2453, 0.0
          %v2971 = vmax.f32 %v2455, 0.0
          %v2972 = vmax.f32 %v2496, 0.0
          %v2973 = vmax.f32 %v2498, 0.0
          %v2974 = vmax.f32 %v2539, 0.0
          %v2975 = vmax.f32 %v2541, 0.0
          %v2976 = vmax.f32 %v2582, 0.0
          %v2977 = vmax.f32 %v2584, 0.0
          %v2978 = vmax.f32 %v2625, 0.0
          %v2979 = vmax.f32 %v2627, 0.0
          %v2980 = vmax.f32 %v2668, 0.0
          %v2981 = vmax.f32 %v2670, 0.0
          %v2982 = vmax.f32 %v2711, 0.0
          %v2983 = vmax.f32 %v2713, 0.0
          %v2984 = vmax.f32 %v2754, 0.0
          %v2985 = vmax.f32 %v2756, 0.0
          %v2986 = vmax.f32 %v2797, 0.0
          %v2987 = vmax.f32 %v2799, 0.0
          %v2988 = vmax.f32 %v2840, 0.0
          %v2989 = vmax.f32 %v2842, 0.0
          %v2990 = vmax.f32 %v2883, 0.0
          %v2991 = vmax.f32 %v2885, 0.0
          %v2992 = vmax.f32 %v2926, 0.0
          %v2993 = vmax.f32 %v2928, 0.0
          %2994 = vst [vmem:[%s420] sm:$0xff] %v2930
          %2995 = vst [vmem:[%s420 + $0x8] sm:$0xff] %v2931
          %2996 = vst [vmem:[%s420 + $0x10] sm:$0xff] %v2932
          %2997 = vst [vmem:[%s420 + $0x18] sm:$0xff] %v2933
          %2998 = vst [vmem:[%s420 + $0x20] sm:$0xff] %v2934
          %2999 = vst [vmem:[%s420 + $0x28] sm:$0xff] %v2935
          %3000 = vst [vmem:[%s420 + $0x30] sm:$0xff] %v2936
          %3001 = vst [vmem:[%s420 + $0x38] sm:$0xff] %v2937
          %3002 = vst [vmem:[%s420 + $0x40] sm:$0xff] %v2938
          %3003 = vst [vmem:[%s420 + $0x48] sm:$0xff] %v2939
          %3004 = vst [vmem:[%s420 + $0x50] sm:$0xff] %v2940
          %3005 = vst [vmem:[%s420 + $0x58] sm:$0xff] %v2941
          %3006 = vst [vmem:[%s420 + $0x60] sm:$0xff] %v2942
          %3007 = vst [vmem:[%s420 + $0x68] sm:$0xff] %v2943
          %3008 = vst [vmem:[%s420 + $0x70] sm:$0xff] %v2944
          %3009 = vst [vmem:[%s420 + $0x78] sm:$0xff] %v2945
          %3010 = vst [vmem:[%s420 + $0x80] sm:$0xff] %v2946
          %3011 = vst [vmem:[%s420 + $0x88] sm:$0xff] %v2947
          %3012 = vst [vmem:[%s420 + $0x90] sm:$0xff] %v2948
          %3013 = vst [vmem:[%s420 + $0x98] sm:$0xff] %v2949
          %3014 = vst [vmem:[%s420 + $0xa0] sm:$0xff] %v2950
          %3015 = vst [vmem:[%s420 + $0xa8] sm:$0xff] %v2951
          %3016 = vst [vmem:[%s420 + $0xb0] sm:$0xff] %v2952
          %3017 = vst [vmem:[%s420 + $0xb8] sm:$0xff] %v2953
          %3018 = vst [vmem:[%s420 + $0xc0] sm:$0xff] %v2954
          %3019 = vst [vmem:[%s420 + $0xc8] sm:$0xff] %v2955
          %3020 = vst [vmem:[%s420 + $0xd0] sm:$0xff] %v2956
          %3021 = vst [vmem:[%s420 + $0xd8] sm:$0xff] %v2957
          %3022 = vst [vmem:[%s420 + $0xe0] sm:$0xff] %v2958
          %3023 = vst [vmem:[%s420 + $0xe8] sm:$0xff] %v2959
          %3024 = vst [vmem:[%s420 + $0xf0] sm:$0xff] %v2960
          %3025 = vst [vmem:[%s420 + $0xf8] sm:$0xff] %v2961
          %3026 = vst [vmem:[%s420 + $0x100] sm:$0xff] %v2962
          %3027 = vst [vmem:[%s420 + $0x108] sm:$0xff] %v2963
          %3028 = vst [vmem:[%s420 + $0x110] sm:$0xff] %v2964
          %3029 = vst [vmem:[%s420 + $0x118] sm:$0xff] %v2965
          %3030 = vst [vmem:[%s420 + $0x120] sm:$0xff] %v2966
          %3031 = vst [vmem:[%s420 + $0x128] sm:$0xff] %v2967
          %3032 = vst [vmem:[%s420 + $0x130] sm:$0xff] %v2968
          %3033 = vst [vmem:[%s420 + $0x138] sm:$0xff] %v2969
          %3034 = vst [vmem:[%s420 + $0x140] sm:$0xff] %v2970
          %3035 = vst [vmem:[%s420 + $0x148] sm:$0xff] %v2971
          %3036 = vst [vmem:[%s420 + $0x150] sm:$0xff] %v2972
          %3037 = vst [vmem:[%s420 + $0x158] sm:$0xff] %v2973
          %3038 = vst [vmem:[%s420 + $0x160] sm:$0xff] %v2974
          %3039 = vst [vmem:[%s420 + $0x168] sm:$0xff] %v2975
          %3040 = vst [vmem:[%s420 + $0x170] sm:$0xff] %v2976
          %3041 = vst [vmem:[%s420 + $0x178] sm:$0xff] %v2977
          %3042 = vst [vmem:[%s420 + $0x180] sm:$0xff] %v2978
          %3043 = vst [vmem:[%s420 + $0x188] sm:$0xff] %v2979
          %3044 = vst [vmem:[%s420 + $0x190] sm:$0xff] %v2980
          %3045 = vst [vmem:[%s420 + $0x198] sm:$0xff] %v2981
          %3046 = vst [vmem:[%s420 + $0x1a0] sm:$0xff] %v2982
          %3047 = vst [vmem:[%s420 + $0x1a8] sm:$0xff] %v2983
          %3048 = vst [vmem:[%s420 + $0x1b0] sm:$0xff] %v2984
          %3049 = vst [vmem:[%s420 + $0x1b8] sm:$0xff] %v2985
          %3050 = vst [vmem:[%s420 + $0x1c0] sm:$0xff] %v2986
          %3051 = vst [vmem:[%s420 + $0x1c8] sm:$0xff] %v2987
          %3052 = vst [vmem:[%s420 + $0x1d0] sm:$0xff] %v2988
          %3053 = vst [vmem:[%s420 + $0x1d8] sm:$0xff] %v2989
          %3054 = vst [vmem:[%s420 + $0x1e0] sm:$0xff] %v2990
          %3055 = vst [vmem:[%s420 + $0x1e8] sm:$0xff] %v2991
          %3056 = vst [vmem:[%s420 + $0x1f0] sm:$0xff] %v2992
          %3057 = vst [vmem:[%s420 + $0x1f8] sm:$0xff] %v2993
        $region68: #{tpu_custom_call.1} parent=39 // pred_fallthru
          _
        %s3058 = sand.u32 %s193, 1
        %s3059 = scalar_lea.sflag [#allocation5], %s3058
        %s3060 = sand.u32 %s193, 1
        %s3061 = smul.addr %s3060, 512
        %s3062 = scalar_lea.vmem [#allocation12], %s3061
        // Predicated region
        $region69: #{tpu_custom_call.1} parent=39 // pred_check
          %p3063 = pneg %p203
        $region70: #{tpu_custom_call.1} parent=39 // pred_check_branch
          %3065 = sbr.rel (%p3063) target = $region72
        $region71: #{tpu_custom_call.1} parent=39 // pred_region
          %s3066 = smul.u32 2, %s34
          %s3068 = ssub.s32 8192, 8192
          %3069 = vsyncadd %s3059, %s3068
          %s3070 = smul.addr %s3066, 32
          %s3071 = smul.addr %s33, 64
          %s3072 = sadd.s32 %s3070, %s3071
          %s3073 = smul.addr %s3072, 128
          %s3074 = scalar_lea.hbm %s5, %s3073
          %s3075 = sshll.u32 %s3062, 4
          %s3076 = int_to_ptr.vmem [resolvable:$true] %s3075
          %3081 = dma.vmem_to_hbm [thread:$0]  %s3076, 8192, %s3074, %s3059, 4096, 4096, 256
        $region72: #{tpu_custom_call.1} parent=39 // pred_fallthru
          _
      $region40: #{tpu_custom_call.1} parent=5 // pred_fallthru
        _
      %p3082 = scmp.le.s32.totalorder 2, %s23
      // Predicated region
      $region73: #{tpu_custom_call.1} parent=5 // pred_check
        %p3083 = pneg %p3082
      $region74: #{tpu_custom_call.1} parent=5 // pred_check_branch
        %3085 = sbr.rel (%p3083) target = $region76
      $region75: #{tpu_custom_call.1} parent=5 // pred_region
        %s3086 = ssub.s32 %s23, 2
        // Predicated region
        $region77: #{tpu_custom_call.1} parent=75 // pred_check
          %p3087 = pneg %p209
        $region78: #{tpu_custom_call.1} parent=75 // pred_check_branch
          %3089 = sbr.rel (%p3087) target = $region80
        $region79: #{tpu_custom_call.1} parent=75 // pred_region
          %s3090 = sand.u32 %s194, 1
          %s3091 = scalar_lea.sflag [#allocation5], %s3090
          %s3092 = sand.u32 %s194, 1
          %s3093 = smul.addr %s3092, 512
          %s3094 = scalar_lea.vmem [#allocation12], %s3093
          %3095 = dma.done %s3091, 8192
        $region80: #{tpu_custom_call.1} parent=75 // pred_fallthru
          _
      $region76: #{tpu_custom_call.1} parent=5 // pred_fallthru
        _
    $region6: #{tpu_custom_call.1} parent=1 // loop_footer
      %s27 = sadd.s32 1, %s23
    $region7: #{tpu_custom_call.1} parent=1 // loop_footer_branch
      %22 = sbr.rel target = $region3
    $region8: #{tpu_custom_call.1} parent=1 // loop_exit
      _
    %3096 = vsyncpa [#allocation4], 1
    %s3097 = scalar_lea.sflag [#allocation4], 1
    %3098 = vsyncpa %s3097, 1
    %3099 = vsyncpa [#allocation7], 1
    %s3100 = scalar_lea.sflag [#allocation7], 1
    %3101 = vsyncpa %s3100, 1
    %3102 = vsyncpa [#allocation10], 1
    %s3103 = scalar_lea.sflag [#allocation10], 1
    %3104 = vsyncpa %s3103, 1
    %3105 = vsyncpa [#allocation5], 1
    %s3106 = scalar_lea.sflag [#allocation5], 1
    %3107 = vsyncpa %s3106, 1

</llo_original>
